<compile_context>
chip_gen: v6e
topology: v6e:2x2x1
jax: 0.10.0
libtpu: 0.0.40
codegen_flags: <defaults>
</compile_context>

<pallas_src>
import numpy as np
import jax
import jax.numpy as jnp
from jax import lax
from jax.experimental import pallas as pl
from jax.experimental.pallas import tpu as pltpu


# ---------------------------------------------------------------------------
# Kernel
# ---------------------------------------------------------------------------
def _make_aligner_kernel(L1, L2, K, n_layers, c0):
    """c0 = input feature channels padded up to a sublane tile (6 -> 8)."""
    P = (K - 1) // 2
    Wp = L2 + 2 * P
    Hp = L1 + 2 * P
    F = Hp * Wp                              # logical flat padded-image size
    Fp = ((F + 127) // 128) * 128            # lane-dense slab width
    L1L2 = L1 * L2

    def kernel(*refs):
        wf_ref, tfb_ref, scat_ref, gath_ref, mask_ref = refs[:5]
        layer_refs = refs[5:5 + 2 * n_layers]
        out_ref = refs[5 + 2 * n_layers]

        tfwd = tfb_ref[0]                    # (L1L2, L1L2) per-row (block) cumsum
        tbwd = tfb_ref[1]                    # (L1L2, L1L2) per-row reverse cumsum

        # ---- stack_attention: 6 feature channels via two block-cumsum matmuls ----
        w12 = wf_ref[0]                                                 # (2, L1L2)
        cfwd = jnp.dot(w12, tfwd, preferred_element_type=jnp.float32)   # [a1, a2]
        cbwd = jnp.dot(w12, tbwd, preferred_element_type=jnp.float32)   # [a1b, a2b]
        parts = [w12, cfwd, cbwd]
        if c0 > 6:
            parts.append(jnp.zeros((c0 - 6, L1L2), jnp.float32))
        feat = jnp.concatenate(parts, axis=0)                           # (c0, L1L2)

        # ---- scatter into the zero-padded flat slab (c0, Fp); pads are exact 0 ----
        x = jnp.dot(feat, scat_ref[...], preferred_element_type=jnp.float32)
        mask = mask_ref[...]                                            # (1, Fp)

        # ---- conv stack: ONE im2col matmul per layer, taps are XLU lane rolls ----
        for l in range(n_layers):
            w_im = layer_refs[2 * l][...]        # (Cout_eff, K*K*Crows)
            shift = layer_refs[2 * l + 1][...]   # (Cout_eff, 1) folded BN(+Linear) shift
            pieces = []
            for kh in range(K):
                for kw in range(K):
                    d = (kh - P) * Wp + (kw - P)       # want y[i] = x[i + d]
                    s = (-d) % Fp
                    pieces.append(x if s == 0 else pltpu.roll(x, s, axis=1))
            col = jnp.concatenate(pieces, axis=0)       # (K*K*Crows, Fp)
            acc = jnp.dot(w_im, col, preferred_element_type=jnp.float32) + shift
            # Re-zero pad lanes so the next layer's taps see clean zero padding.
            # The last (head-folded) layer needs no mask: the gather below only
            # reads valid lanes.
            x = acc * mask if l < n_layers - 1 else acc

        # ---- head: gather valid lanes -> sigmoid -> block cumsum -> tanh ----------
        g = jnp.dot(x, gath_ref[...], preferred_element_type=jnp.float32)  # (2, L1L2)
        sg = jax.nn.sigmoid(g)
        cum = jnp.dot(sg, tfwd, preferred_element_type=jnp.float32)
        out_ref[0] = jnp.tanh(cum)                       # single lane-dense store

    return kernel


# ---------------------------------------------------------------------------
# Host-side constant / weight preparation
# ---------------------------------------------------------------------------
def _prep_constants(L1, L2, K):
    P = (K - 1) // 2
    Wp, Hp = L2 + 2 * P, L1 + 2 * P
    F = Hp * Wp
    Fp = ((F + 127) // 128) * 128
    L1L2 = L1 * L2
    hh = np.arange(L1L2) // L2
    ww = np.arange(L1L2) % L2
    same = hh[:, None] == hh[None, :]
    tfwd = (same & (ww[:, None] <= ww[None, :])).astype(np.float32)   # block cumsum
    tbwd = (same & (ww[:, None] >= ww[None, :])).astype(np.float32)   # block reverse
    scat = np.zeros((L1L2, Fp), np.float32)
    scat[np.arange(L1L2), (P + hh) * Wp + (P + ww)] = 1.0             # place into pads
    gath = np.ascontiguousarray(scat.T)                               # (Fp, L1L2)
    mask = scat.sum(axis=0, keepdims=True)                            # (1, Fp) valid lanes
    return (jnp.asarray(np.stack([tfwd, tbwd], 0)), jnp.asarray(scat),
            jnp.asarray(gath), jnp.asarray(mask))


def _prep_layer_weights(params, c0):
    """Per-layer (Cout_eff, K*K*Crows) im2col weights with eval-mode BN folded in and
    the Linear head folded into the LAST conv layer (Cout_eff = 2 there)."""
    convs = params["convs"]
    n_layers = len(convs)
    out = []
    c_rows = c0
    for l, layer in enumerate(convs):
        w = layer["w_oihw"]                                  # (Cout, Cin, K, K)
        cout, cin, kk, _ = w.shape
        if l == n_layers - 1:
            lwT = params["linear_w"].T                       # (2, Cout)
            w_eff = jnp.einsum("oc,cikl->oikl", lwT * layer["scale"][None, :], w)
            shift = lwT @ layer["shift"] + params["linear_b"]            # (2,)
        else:
            w_eff = w * layer["scale"][:, None, None, None]
            shift = layer["shift"]
        w_t = jnp.transpose(w_eff, (0, 2, 3, 1))             # (Cout_eff, K, K, Cin)
        if c_rows > cin:                                     # layer 0: pad cin 6 -> 8
            w_t = jnp.pad(w_t, ((0, 0), (0, 0), (0, 0), (0, c_rows - cin)))
        out.append((w_t.reshape(w_t.shape[0], kk * kk * c_rows),
                    shift.reshape(-1, 1)))
        c_rows = cout
    return out


# ---------------------------------------------------------------------------
# Forward wrapper
# ---------------------------------------------------------------------------
def aligner_forward(params, w1, w2, token_lengths=None, spectrum_lengths=None):
    """w1: [B, L2, L1], w2: [B, L1, L2]  ->  boundaries [B, L1, 2, L2]."""
    del token_lengths, spectrum_lengths        # unused by the torch forward as well
    w1p = jnp.transpose(w1, (0, 2, 1))         # torch's permute(0, 2, 1)
    B, L1, L2 = w1p.shape
    convs = params["convs"]
    n_layers = len(convs)
    in_ch = convs[0]["w_oihw"].shape[1]
    K = convs[0]["w_oihw"].shape[-1]
    P = (K - 1) // 2
    F = (L1 + 2 * P) * (L2 + 2 * P)
    Fp = ((F + 127) // 128) * 128
    L1L2 = L1 * L2
    c0 = max(8, ((in_ch + 7) // 8) * 8)

    # free host-side glue: lane-major flat rows [w1.permute, w2] per batch
    wflat = jnp.stack([w1p.reshape(B, L1L2), w2.reshape(B, L1L2)], axis=1)  # (B,2,L1L2)

    tfb, scat, gath, mask = _prep_constants(L1, L2, K)
    layer_ws = _prep_layer_weights(params, c0)

    def const_spec(shape):
        n = len(shape)
        return pl.BlockSpec(shape, lambda b, n=n: (0,) * n)

    in_specs = [pl.BlockSpec((1, 2, L1L2), lambda b: (b, 0, 0)),
                const_spec((2, L1L2, L1L2)),
                const_spec((L1L2, Fp)),
                const_spec((Fp, L1L2)),
                const_spec((1, Fp))]
    args = [wflat, tfb, scat, gath, mask]
    for w_im, shift in layer_ws:
        in_specs += [const_spec(tuple(w_im.shape)), const_spec(tuple(shift.shape))]
        args += [w_im, shift]

    out = pl.pallas_call(
        _make_aligner_kernel(L1, L2, K, n_layers, c0),
        out_shape=jax.ShapeDtypeStruct((B, 2, L1L2), jnp.float32),
        grid_spec=pltpu.PrefetchScalarGridSpec(
            num_scalar_prefetch=0,
            grid=(B,),
            in_specs=in_specs,
            out_specs=pl.BlockSpec((1, 2, L1L2), lambda b: (b, 0, 0)),
        ),
        compiler_params=pltpu.CompilerParams(
            dimension_semantics=("parallel",),
            vmem_limit_bytes=32 * 1024 * 1024),
    )(*args)
    # free XLA glue: (B, 2, L1*L2) -> [B, L1, 2, L2]
    return jnp.transpose(out.reshape(B, 2, L1, L2), (0, 2, 1, 3))


# ---------------------------------------------------------------------------
# Deterministic parameter initialization (synthetic, no checkpoint load).
# ---------------------------------------------------------------------------
def init_params(key, in_channels=6, kernel_size=5, filter_sizes=(16, 16, 16)):
    filters = [in_channels] + list(filter_sizes)
    eps = 1e-5
    convs = []
    for i in range(len(filter_sizes)):
        key, k1, k2, k3, k4, k5 = jax.random.split(key, 6)
        cin, cout = filters[i], filters[i + 1]
        fan_in = cin * kernel_size * kernel_size
        w = jax.random.normal(k1, (cout, cin, kernel_size, kernel_size),
                              jnp.float32) / np.sqrt(fan_in)
        gamma = 1.0 + 0.1 * jax.random.normal(k2, (cout,), jnp.float32)
        beta = 0.1 * jax.random.normal(k3, (cout,), jnp.float32)
        rmean = 0.1 * jax.random.normal(k4, (cout,), jnp.float32)
        rvar = 1.0 + 0.1 * jax.random.uniform(k5, (cout,), jnp.float32)
        scale = gamma / jnp.sqrt(rvar + eps)      # eval-mode BN -> per-channel affine
        shift = beta - rmean * scale
        convs.append({"w_oihw": w, "scale": scale, "shift": shift})
    key, k1, k2 = jax.random.split(key, 3)
    C = filters[-1]
    wl = jax.random.normal(k1, (C, 2), jnp.float32) / np.sqrt(C)
    bl = 0.1 * jax.random.normal(k2, (2,), jnp.float32)
    return {"convs": convs, "linear_w": wl, "linear_b": bl}


# ---------------------------------------------------------------------------
# Pure-JAX reference (mirrors the torch module with eval-mode BatchNorm).
# ---------------------------------------------------------------------------
def reference_forward(params, w1, w2):
    w1p = jnp.transpose(w1, (0, 2, 1))
    a1 = jnp.cumsum(w1p, -1)
    a2 = jnp.cumsum(w2, -1)
    a1b = jnp.flip(jnp.cumsum(jnp.flip(w1p, -1), -1), -1)
    a2b = jnp.flip(jnp.cumsum(jnp.flip(w2, -1), -1), -1)
    x = jnp.stack([w1p, w2, a1, a2, a1b, a2b], axis=-1)          # [B, L1, L2, 6]
    x = jnp.transpose(x, (0, 3, 1, 2))                            # NCHW
    for layer in params["convs"]:
        w = layer["w_oihw"]
        P = (w.shape[-1] - 1) // 2
        x = lax.conv_general_dilated(x, w, (1, 1), ((P, P), (P, P)),
                                     dimension_numbers=("NCHW", "OIHW", "NCHW"),
                                     precision=lax.Precision.HIGHEST)
        x = x * layer["scale"][None, :, None, None] + layer["shift"][None, :, None, None]
    x = jnp.transpose(x, (0, 2, 3, 1))                            # [B, L1, L2, C]
    x = jnp.dot(x, params["linear_w"],
                precision=lax.Precision.HIGHEST) + params["linear_b"]
    x = jax.nn.sigmoid(x)
    x = jnp.swapaxes(x, -1, -2)                                   # [B, L1, 2, L2]
    x = jnp.cumsum(x, -1)
    return jnp.tanh(x)


if __name__ == "__main__":
    B, L1, L2 = 2, 8, 16
    in_channels, kernel_size, filter_sizes = 6, 5, (16, 16, 16)

    key = jax.random.PRNGKey(0)
    kp, kw1, kw2 = jax.random.split(key, 3)
    params = init_params(kp, in_channels, kernel_size, filter_sizes)

    w1 = 0.5 * jax.random.normal(kw1, (B, L2, L1), jnp.float32)   # [B, max_len2, max_len1]
    w2 = 0.5 * jax.random.normal(kw2, (B, L1, L2), jnp.float32)   # [B, max_len1, max_len2]
    token_lengths = jnp.full((B, L1), L1, jnp.int32)              # unused by forward
    spectrum_lengths = jnp.full((B, L2), L2, jnp.int32)           # unused by forward

    out = aligner_forward(params, w1, w2, token_lengths, spectrum_lengths)
    out = jax.block_until_ready(out)

    ref = reference_forward(params, w1, w2)
    np.testing.assert_allclose(np.asarray(out), np.asarray(ref), rtol=2e-3, atol=2e-3)
    assert out.shape == (B, L1, 2, L2) and out.dtype == jnp.float32

    print("KERNEL_OK")
</pallas_src>

<mosaic_0001>
module attributes {stable_mosaic.version = 11 : i64} {
  func.func @kernel(%arg0: i32, %arg1: memref<1x2x128xf32, #tpu.memory_space<vmem>>, %arg2: memref<2x128x128xf32, #tpu.memory_space<vmem>>, %arg3: memref<128x256xf32, #tpu.memory_space<vmem>>, %arg4: memref<256x128xf32, #tpu.memory_space<vmem>>, %arg5: memref<1x256xf32, #tpu.memory_space<vmem>>, %arg6: memref<16x200xf32, #tpu.memory_space<vmem>>, %arg7: memref<16x1xf32, #tpu.memory_space<vmem>>, %arg8: memref<16x400xf32, #tpu.memory_space<vmem>>, %arg9: memref<16x1xf32, #tpu.memory_space<vmem>>, %arg10: memref<2x400xf32, #tpu.memory_space<vmem>>, %arg11: memref<2x1xf32, #tpu.memory_space<vmem>>, %arg12: memref<1x2x128xf32, #tpu.memory_space<vmem>>) attributes {dimension_semantics = [#tpu.dimension_semantics<parallel>], iteration_bounds = array<i64: 2>, scalar_prefetch = 0 : i64, scratch_operands = 0 : i64, tpu.core_type = #tpu.core_type<tc>, window_params = [{transform_indices = @transform_0, window_bounds = array<i64: 1, 2, 128>}, {pipeline_mode = #tpu.pipeline_mode<synchronous>, transform_indices = @transform_1, window_bounds = array<i64: 2, 128, 128>}, {pipeline_mode = #tpu.pipeline_mode<synchronous>, transform_indices = @transform_2, window_bounds = array<i64: 128, 256>}, {pipeline_mode = #tpu.pipeline_mode<synchronous>, transform_indices = @transform_3, window_bounds = array<i64: 256, 128>}, {pipeline_mode = #tpu.pipeline_mode<synchronous>, transform_indices = @transform_4, window_bounds = array<i64: 1, 256>}, {pipeline_mode = #tpu.pipeline_mode<synchronous>, transform_indices = @transform_5, window_bounds = array<i64: 16, 200>}, {pipeline_mode = #tpu.pipeline_mode<synchronous>, transform_indices = @transform_6, window_bounds = array<i64: 16, 1>}, {pipeline_mode = #tpu.pipeline_mode<synchronous>, transform_indices = @transform_7, window_bounds = array<i64: 16, 400>}, {pipeline_mode = #tpu.pipeline_mode<synchronous>, transform_indices = @transform_8, window_bounds = array<i64: 16, 1>}, {pipeline_mode = #tpu.pipeline_mode<synchronous>, transform_indices = @transform_9, window_bounds = array<i64: 2, 400>}, {pipeline_mode = #tpu.pipeline_mode<synchronous>, transform_indices = @transform_10, window_bounds = array<i64: 2, 1>}, {transform_indices = @transform_11, window_bounds = array<i64: 1, 2, 128>}]} {
    %c0 = arith.constant 0 : index
    %c0_0 = arith.constant 0 : index
    %c0_1 = arith.constant 0 : index
    %0 = vector.load %arg2[%c0, %c0_0, %c0_1] : memref<2x128x128xf32, #tpu.memory_space<vmem>>, vector<1x128x128xf32>
    %1 = vector.shape_cast %0 : vector<1x128x128xf32> to vector<128x128xf32>
    %c1 = arith.constant 1 : index
    %c0_2 = arith.constant 0 : index
    %c0_3 = arith.constant 0 : index
    %2 = vector.load %arg2[%c1, %c0_2, %c0_3] : memref<2x128x128xf32, #tpu.memory_space<vmem>>, vector<1x128x128xf32>
    %3 = vector.shape_cast %2 : vector<1x128x128xf32> to vector<128x128xf32>
    %c0_4 = arith.constant 0 : index
    %c0_5 = arith.constant 0 : index
    %c0_6 = arith.constant 0 : index
    %4 = vector.load %arg1[%c0_4, %c0_5, %c0_6] : memref<1x2x128xf32, #tpu.memory_space<vmem>>, vector<1x2x128xf32>
    %5 = vector.shape_cast %4 : vector<1x2x128xf32> to vector<2x128xf32>
    %cst = arith.constant dense<0.000000e+00> : vector<2x128xf32>
    %6 = tpu.matmul %5, %1, %cst {dimension_numbers = #tpu.dot_dimension_numbers<[1], [0], [0], [1], [0, 0, 1, 1], [], []>} : vector<2x128xf32>, vector<128x128xf32>, vector<2x128xf32> -> vector<2x128xf32>
    %cst_7 = arith.constant dense<0.000000e+00> : vector<2x128xf32>
    %7 = tpu.matmul %5, %3, %cst_7 {dimension_numbers = #tpu.dot_dimension_numbers<[1], [0], [0], [1], [0, 0, 1, 1], [], []>} : vector<2x128xf32>, vector<128x128xf32>, vector<2x128xf32> -> vector<2x128xf32>
    %cst_8 = arith.constant 0.000000e+00 : f32
    %8 = vector.broadcast %cst_8 : f32 to vector<2x128xf32>
    %9 = tpu.concatenate %5, %6, %7, %8 in 0 : vector<2x128xf32>, vector<2x128xf32>, vector<2x128xf32>, vector<2x128xf32> -> vector<8x128xf32>
    %c0_9 = arith.constant 0 : index
    %c0_10 = arith.constant 0 : index
    %10 = vector.load %arg3[%c0_9, %c0_10] : memref<128x256xf32, #tpu.memory_space<vmem>>, vector<128x256xf32>
    %cst_11 = arith.constant dense<0.000000e+00> : vector<8x256xf32>
    %11 = tpu.matmul %9, %10, %cst_11 {dimension_numbers = #tpu.dot_dimension_numbers<[1], [0], [0], [1], [0, 0, 1, 1], [], []>} : vector<8x128xf32>, vector<128x256xf32>, vector<8x256xf32> -> vector<8x256xf32>
    %c0_12 = arith.constant 0 : index
    %c0_13 = arith.constant 0 : index
    %12 = vector.load %arg5[%c0_12, %c0_13] : memref<1x256xf32, #tpu.memory_space<vmem>>, vector<1x256xf32>
    %c0_14 = arith.constant 0 : index
    %c0_15 = arith.constant 0 : index
    %13 = vector.load %arg6[%c0_14, %c0_15] : memref<16x200xf32, #tpu.memory_space<vmem>>, vector<16x200xf32>
    %c0_16 = arith.constant 0 : index
    %c0_17 = arith.constant 0 : index
    %14 = vector.load %arg7[%c0_16, %c0_17] : memref<16x1xf32, #tpu.memory_space<vmem>>, vector<16x1xf32>
    %c42_i32 = arith.constant 42 : i32
    %15 = tpu.dynamic_rotate %11 by %c42_i32 dim 1 : vector<8x256xf32>, i32 -> vector<8x256xf32>
    %c41_i32 = arith.constant 41 : i32
    %16 = tpu.dynamic_rotate %11 by %c41_i32 dim 1 : vector<8x256xf32>, i32 -> vector<8x256xf32>
    %c40_i32 = arith.constant 40 : i32
    %17 = tpu.dynamic_rotate %11 by %c40_i32 dim 1 : vector<8x256xf32>, i32 -> vector<8x256xf32>
    %c39_i32 = arith.constant 39 : i32
    %18 = tpu.dynamic_rotate %11 by %c39_i32 dim 1 : vector<8x256xf32>, i32 -> vector<8x256xf32>
    %c38_i32 = arith.constant 38 : i32
    %19 = tpu.dynamic_rotate %11 by %c38_i32 dim 1 : vector<8x256xf32>, i32 -> vector<8x256xf32>
    %c22_i32 = arith.constant 22 : i32
    %20 = tpu.dynamic_rotate %11 by %c22_i32 dim 1 : vector<8x256xf32>, i32 -> vector<8x256xf32>
    %c21_i32 = arith.constant 21 : i32
    %21 = tpu.dynamic_rotate %11 by %c21_i32 dim 1 : vector<8x256xf32>, i32 -> vector<8x256xf32>
    %c20_i32 = arith.constant 20 : i32
    %22 = tpu.dynamic_rotate %11 by %c20_i32 dim 1 : vector<8x256xf32>, i32 -> vector<8x256xf32>
    %c19_i32 = arith.constant 19 : i32
    %23 = tpu.dynamic_rotate %11 by %c19_i32 dim 1 : vector<8x256xf32>, i32 -> vector<8x256xf32>
    %c18_i32 = arith.constant 18 : i32
    %24 = tpu.dynamic_rotate %11 by %c18_i32 dim 1 : vector<8x256xf32>, i32 -> vector<8x256xf32>
    %c2_i32 = arith.constant 2 : i32
    %25 = tpu.dynamic_rotate %11 by %c2_i32 dim 1 : vector<8x256xf32>, i32 -> vector<8x256xf32>
    %c1_i32 = arith.constant 1 : i32
    %26 = tpu.dynamic_rotate %11 by %c1_i32 dim 1 : vector<8x256xf32>, i32 -> vector<8x256xf32>
    %c255_i32 = arith.constant 255 : i32
    %27 = tpu.dynamic_rotate %11 by %c255_i32 dim 1 : vector<8x256xf32>, i32 -> vector<8x256xf32>
    %c254_i32 = arith.constant 254 : i32
    %28 = tpu.dynamic_rotate %11 by %c254_i32 dim 1 : vector<8x256xf32>, i32 -> vector<8x256xf32>
    %c238_i32 = arith.constant 238 : i32
    %29 = tpu.dynamic_rotate %11 by %c238_i32 dim 1 : vector<8x256xf32>, i32 -> vector<8x256xf32>
    %c237_i32 = arith.constant 237 : i32
    %30 = tpu.dynamic_rotate %11 by %c237_i32 dim 1 : vector<8x256xf32>, i32 -> vector<8x256xf32>
    %c236_i32 = arith.constant 236 : i32
    %31 = tpu.dynamic_rotate %11 by %c236_i32 dim 1 : vector<8x256xf32>, i32 -> vector<8x256xf32>
    %c235_i32 = arith.constant 235 : i32
    %32 = tpu.dynamic_rotate %11 by %c235_i32 dim 1 : vector<8x256xf32>, i32 -> vector<8x256xf32>
    %c234_i32 = arith.constant 234 : i32
    %33 = tpu.dynamic_rotate %11 by %c234_i32 dim 1 : vector<8x256xf32>, i32 -> vector<8x256xf32>
    %c218_i32 = arith.constant 218 : i32
    %34 = tpu.dynamic_rotate %11 by %c218_i32 dim 1 : vector<8x256xf32>, i32 -> vector<8x256xf32>
    %c217_i32 = arith.constant 217 : i32
    %35 = tpu.dynamic_rotate %11 by %c217_i32 dim 1 : vector<8x256xf32>, i32 -> vector<8x256xf32>
    %c216_i32 = arith.constant 216 : i32
    %36 = tpu.dynamic_rotate %11 by %c216_i32 dim 1 : vector<8x256xf32>, i32 -> vector<8x256xf32>
    %c215_i32 = arith.constant 215 : i32
    %37 = tpu.dynamic_rotate %11 by %c215_i32 dim 1 : vector<8x256xf32>, i32 -> vector<8x256xf32>
    %c214_i32 = arith.constant 214 : i32
    %38 = tpu.dynamic_rotate %11 by %c214_i32 dim 1 : vector<8x256xf32>, i32 -> vector<8x256xf32>
    %39 = tpu.concatenate %15, %16, %17, %18, %19, %20, %21, %22, %23, %24, %25, %26, %11, %27, %28, %29 in 0 : vector<8x256xf32>, vector<8x256xf32>, vector<8x256xf32>, vector<8x256xf32>, vector<8x256xf32>, vector<8x256xf32>, vector<8x256xf32>, vector<8x256xf32>, vector<8x256xf32>, vector<8x256xf32>, vector<8x256xf32>, vector<8x256xf32>, vector<8x256xf32>, vector<8x256xf32>, vector<8x256xf32>, vector<8x256xf32> -> vector<128x256xf32>
    %40 = tpu.concatenate %30, %31, %32, %33, %34, %35, %36, %37, %38 in 0 : vector<8x256xf32>, vector<8x256xf32>, vector<8x256xf32>, vector<8x256xf32>, vector<8x256xf32>, vector<8x256xf32>, vector<8x256xf32>, vector<8x256xf32>, vector<8x256xf32> -> vector<72x256xf32>
    %41 = tpu.concatenate %39, %40 in 0 : vector<128x256xf32>, vector<72x256xf32> -> vector<200x256xf32>
    %cst_18 = arith.constant dense<0.000000e+00> : vector<16x256xf32>
    %42 = tpu.matmul %13, %41, %cst_18 {dimension_numbers = #tpu.dot_dimension_numbers<[1], [0], [0], [1], [0, 0, 1, 1], [], []>} : vector<16x200xf32>, vector<200x256xf32>, vector<16x256xf32> -> vector<16x256xf32>
    %43 = vector.broadcast %14 : vector<16x1xf32> to vector<16x256xf32>
    %44 = arith.addf %42, %43 : vector<16x256xf32>
    %45 = vector.broadcast %12 : vector<1x256xf32> to vector<16x256xf32>
    %46 = arith.mulf %44, %45 : vector<16x256xf32>
    %c0_19 = arith.constant 0 : index
    %c0_20 = arith.constant 0 : index
    %47 = vector.load %arg8[%c0_19, %c0_20] : memref<16x400xf32, #tpu.memory_space<vmem>>, vector<16x400xf32>
    %c0_21 = arith.constant 0 : index
    %c0_22 = arith.constant 0 : index
    %48 = vector.load %arg9[%c0_21, %c0_22] : memref<16x1xf32, #tpu.memory_space<vmem>>, vector<16x1xf32>
    %c42_i32_23 = arith.constant 42 : i32
    %49 = tpu.dynamic_rotate %46 by %c42_i32_23 dim 1 : vector<16x256xf32>, i32 -> vector<16x256xf32>
    %c41_i32_24 = arith.constant 41 : i32
    %50 = tpu.dynamic_rotate %46 by %c41_i32_24 dim 1 : vector<16x256xf32>, i32 -> vector<16x256xf32>
    %c40_i32_25 = arith.constant 40 : i32
    %51 = tpu.dynamic_rotate %46 by %c40_i32_25 dim 1 : vector<16x256xf32>, i32 -> vector<16x256xf32>
    %c39_i32_26 = arith.constant 39 : i32
    %52 = tpu.dynamic_rotate %46 by %c39_i32_26 dim 1 : vector<16x256xf32>, i32 -> vector<16x256xf32>
    %c38_i32_27 = arith.constant 38 : i32
    %53 = tpu.dynamic_rotate %46 by %c38_i32_27 dim 1 : vector<16x256xf32>, i32 -> vector<16x256xf32>
    %c22_i32_28 = arith.constant 22 : i32
    %54 = tpu.dynamic_rotate %46 by %c22_i32_28 dim 1 : vector<16x256xf32>, i32 -> vector<16x256xf32>
    %c21_i32_29 = arith.constant 21 : i32
    %55 = tpu.dynamic_rotate %46 by %c21_i32_29 dim 1 : vector<16x256xf32>, i32 -> vector<16x256xf32>
    %c20_i32_30 = arith.constant 20 : i32
    %56 = tpu.dynamic_rotate %46 by %c20_i32_30 dim 1 : vector<16x256xf32>, i32 -> vector<16x256xf32>
    %c19_i32_31 = arith.constant 19 : i32
    %57 = tpu.dynamic_rotate %46 by %c19_i32_31 dim 1 : vector<16x256xf32>, i32 -> vector<16x256xf32>
    %c18_i32_32 = arith.constant 18 : i32
    %58 = tpu.dynamic_rotate %46 by %c18_i32_32 dim 1 : vector<16x256xf32>, i32 -> vector<16x256xf32>
    %c2_i32_33 = arith.constant 2 : i32
    %59 = tpu.dynamic_rotate %46 by %c2_i32_33 dim 1 : vector<16x256xf32>, i32 -> vector<16x256xf32>
    %c1_i32_34 = arith.constant 1 : i32
    %60 = tpu.dynamic_rotate %46 by %c1_i32_34 dim 1 : vector<16x256xf32>, i32 -> vector<16x256xf32>
    %c255_i32_35 = arith.constant 255 : i32
    %61 = tpu.dynamic_rotate %46 by %c255_i32_35 dim 1 : vector<16x256xf32>, i32 -> vector<16x256xf32>
    %c254_i32_36 = arith.constant 254 : i32
    %62 = tpu.dynamic_rotate %46 by %c254_i32_36 dim 1 : vector<16x256xf32>, i32 -> vector<16x256xf32>
    %c238_i32_37 = arith.constant 238 : i32
    %63 = tpu.dynamic_rotate %46 by %c238_i32_37 dim 1 : vector<16x256xf32>, i32 -> vector<16x256xf32>
    %c237_i32_38 = arith.constant 237 : i32
    %64 = tpu.dynamic_rotate %46 by %c237_i32_38 dim 1 : vector<16x256xf32>, i32 -> vector<16x256xf32>
    %c236_i32_39 = arith.constant 236 : i32
    %65 = tpu.dynamic_rotate %46 by %c236_i32_39 dim 1 : vector<16x256xf32>, i32 -> vector<16x256xf32>
    %c235_i32_40 = arith.constant 235 : i32
    %66 = tpu.dynamic_rotate %46 by %c235_i32_40 dim 1 : vector<16x256xf32>, i32 -> vector<16x256xf32>
    %c234_i32_41 = arith.constant 234 : i32
    %67 = tpu.dynamic_rotate %46 by %c234_i32_41 dim 1 : vector<16x256xf32>, i32 -> vector<16x256xf32>
    %c218_i32_42 = arith.constant 218 : i32
    %68 = tpu.dynamic_rotate %46 by %c218_i32_42 dim 1 : vector<16x256xf32>, i32 -> vector<16x256xf32>
    %c217_i32_43 = arith.constant 217 : i32
    %69 = tpu.dynamic_rotate %46 by %c217_i32_43 dim 1 : vector<16x256xf32>, i32 -> vector<16x256xf32>
    %c216_i32_44 = arith.constant 216 : i32
    %70 = tpu.dynamic_rotate %46 by %c216_i32_44 dim 1 : vector<16x256xf32>, i32 -> vector<16x256xf32>
    %c215_i32_45 = arith.constant 215 : i32
    %71 = tpu.dynamic_rotate %46 by %c215_i32_45 dim 1 : vector<16x256xf32>, i32 -> vector<16x256xf32>
    %c214_i32_46 = arith.constant 214 : i32
    %72 = tpu.dynamic_rotate %46 by %c214_i32_46 dim 1 : vector<16x256xf32>, i32 -> vector<16x256xf32>
    %73 = tpu.concatenate %49, %50, %51, %52, %53, %54, %55, %56, %57, %58, %59, %60, %46, %61, %62, %63 in 0 : vector<16x256xf32>, vector<16x256xf32>, vector<16x256xf32>, vector<16x256xf32>, vector<16x256xf32>, vector<16x256xf32>, vector<16x256xf32>, vector<16x256xf32>, vector<16x256xf32>, vector<16x256xf32>, vector<16x256xf32>, vector<16x256xf32>, vector<16x256xf32>, vector<16x256xf32>, vector<16x256xf32>, vector<16x256xf32> -> vector<256x256xf32>
    %74 = tpu.concatenate %64, %65, %66, %67, %68, %69, %70, %71, %72 in 0 : vector<16x256xf32>, vector<16x256xf32>, vector<16x256xf32>, vector<16x256xf32>, vector<16x256xf32>, vector<16x256xf32>, vector<16x256xf32>, vector<16x256xf32>, vector<16x256xf32> -> vector<144x256xf32>
    %75 = tpu.concatenate %73, %74 in 0 : vector<256x256xf32>, vector<144x256xf32> -> vector<400x256xf32>
    %cst_47 = arith.constant dense<0.000000e+00> : vector<16x256xf32>
    %76 = tpu.matmul %47, %75, %cst_47 {dimension_numbers = #tpu.dot_dimension_numbers<[1], [0], [0], [1], [0, 0, 1, 1], [], []>} : vector<16x400xf32>, vector<400x256xf32>, vector<16x256xf32> -> vector<16x256xf32>
    %77 = vector.broadcast %48 : vector<16x1xf32> to vector<16x256xf32>
    %78 = arith.addf %76, %77 : vector<16x256xf32>
    %79 = vector.broadcast %12 : vector<1x256xf32> to vector<16x256xf32>
    %80 = arith.mulf %78, %79 : vector<16x256xf32>
    %c0_48 = arith.constant 0 : index
    %c0_49 = arith.constant 0 : index
    %81 = vector.load %arg10[%c0_48, %c0_49] : memref<2x400xf32, #tpu.memory_space<vmem>>, vector<2x400xf32>
    %c0_50 = arith.constant 0 : index
    %c0_51 = arith.constant 0 : index
    %82 = vector.load %arg11[%c0_50, %c0_51] : memref<2x1xf32, #tpu.memory_space<vmem>>, vector<2x1xf32>
    %c42_i32_52 = arith.constant 42 : i32
    %83 = tpu.dynamic_rotate %80 by %c42_i32_52 dim 1 : vector<16x256xf32>, i32 -> vector<16x256xf32>
    %c41_i32_53 = arith.constant 41 : i32
    %84 = tpu.dynamic_rotate %80 by %c41_i32_53 dim 1 : vector<16x256xf32>, i32 -> vector<16x256xf32>
    %c40_i32_54 = arith.constant 40 : i32
    %85 = tpu.dynamic_rotate %80 by %c40_i32_54 dim 1 : vector<16x256xf32>, i32 -> vector<16x256xf32>
    %c39_i32_55 = arith.constant 39 : i32
    %86 = tpu.dynamic_rotate %80 by %c39_i32_55 dim 1 : vector<16x256xf32>, i32 -> vector<16x256xf32>
    %c38_i32_56 = arith.constant 38 : i32
    %87 = tpu.dynamic_rotate %80 by %c38_i32_56 dim 1 : vector<16x256xf32>, i32 -> vector<16x256xf32>
    %c22_i32_57 = arith.constant 22 : i32
    %88 = tpu.dynamic_rotate %80 by %c22_i32_57 dim 1 : vector<16x256xf32>, i32 -> vector<16x256xf32>
    %c21_i32_58 = arith.constant 21 : i32
    %89 = tpu.dynamic_rotate %80 by %c21_i32_58 dim 1 : vector<16x256xf32>, i32 -> vector<16x256xf32>
    %c20_i32_59 = arith.constant 20 : i32
    %90 = tpu.dynamic_rotate %80 by %c20_i32_59 dim 1 : vector<16x256xf32>, i32 -> vector<16x256xf32>
    %c19_i32_60 = arith.constant 19 : i32
    %91 = tpu.dynamic_rotate %80 by %c19_i32_60 dim 1 : vector<16x256xf32>, i32 -> vector<16x256xf32>
    %c18_i32_61 = arith.constant 18 : i32
    %92 = tpu.dynamic_rotate %80 by %c18_i32_61 dim 1 : vector<16x256xf32>, i32 -> vector<16x256xf32>
    %c2_i32_62 = arith.constant 2 : i32
    %93 = tpu.dynamic_rotate %80 by %c2_i32_62 dim 1 : vector<16x256xf32>, i32 -> vector<16x256xf32>
    %c1_i32_63 = arith.constant 1 : i32
    %94 = tpu.dynamic_rotate %80 by %c1_i32_63 dim 1 : vector<16x256xf32>, i32 -> vector<16x256xf32>
    %c255_i32_64 = arith.constant 255 : i32
    %95 = tpu.dynamic_rotate %80 by %c255_i32_64 dim 1 : vector<16x256xf32>, i32 -> vector<16x256xf32>
    %c254_i32_65 = arith.constant 254 : i32
    %96 = tpu.dynamic_rotate %80 by %c254_i32_65 dim 1 : vector<16x256xf32>, i32 -> vector<16x256xf32>
    %c238_i32_66 = arith.constant 238 : i32
    %97 = tpu.dynamic_rotate %80 by %c238_i32_66 dim 1 : vector<16x256xf32>, i32 -> vector<16x256xf32>
    %c237_i32_67 = arith.constant 237 : i32
    %98 = tpu.dynamic_rotate %80 by %c237_i32_67 dim 1 : vector<16x256xf32>, i32 -> vector<16x256xf32>
    %c236_i32_68 = arith.constant 236 : i32
    %99 = tpu.dynamic_rotate %80 by %c236_i32_68 dim 1 : vector<16x256xf32>, i32 -> vector<16x256xf32>
    %c235_i32_69 = arith.constant 235 : i32
    %100 = tpu.dynamic_rotate %80 by %c235_i32_69 dim 1 : vector<16x256xf32>, i32 -> vector<16x256xf32>
    %c234_i32_70 = arith.constant 234 : i32
    %101 = tpu.dynamic_rotate %80 by %c234_i32_70 dim 1 : vector<16x256xf32>, i32 -> vector<16x256xf32>
    %c218_i32_71 = arith.constant 218 : i32
    %102 = tpu.dynamic_rotate %80 by %c218_i32_71 dim 1 : vector<16x256xf32>, i32 -> vector<16x256xf32>
    %c217_i32_72 = arith.constant 217 : i32
    %103 = tpu.dynamic_rotate %80 by %c217_i32_72 dim 1 : vector<16x256xf32>, i32 -> vector<16x256xf32>
    %c216_i32_73 = arith.constant 216 : i32
    %104 = tpu.dynamic_rotate %80 by %c216_i32_73 dim 1 : vector<16x256xf32>, i32 -> vector<16x256xf32>
    %c215_i32_74 = arith.constant 215 : i32
    %105 = tpu.dynamic_rotate %80 by %c215_i32_74 dim 1 : vector<16x256xf32>, i32 -> vector<16x256xf32>
    %c214_i32_75 = arith.constant 214 : i32
    %106 = tpu.dynamic_rotate %80 by %c214_i32_75 dim 1 : vector<16x256xf32>, i32 -> vector<16x256xf32>
    %107 = tpu.concatenate %83, %84, %85, %86, %87, %88, %89, %90, %91, %92, %93, %94, %80, %95, %96, %97 in 0 : vector<16x256xf32>, vector<16x256xf32>, vector<16x256xf32>, vector<16x256xf32>, vector<16x256xf32>, vector<16x256xf32>, vector<16x256xf32>, vector<16x256xf32>, vector<16x256xf32>, vector<16x256xf32>, vector<16x256xf32>, vector<16x256xf32>, vector<16x256xf32>, vector<16x256xf32>, vector<16x256xf32>, vector<16x256xf32> -> vector<256x256xf32>
    %108 = tpu.concatenate %98, %99, %100, %101, %102, %103, %104, %105, %106 in 0 : vector<16x256xf32>, vector<16x256xf32>, vector<16x256xf32>, vector<16x256xf32>, vector<16x256xf32>, vector<16x256xf32>, vector<16x256xf32>, vector<16x256xf32>, vector<16x256xf32> -> vector<144x256xf32>
    %109 = tpu.concatenate %107, %108 in 0 : vector<256x256xf32>, vector<144x256xf32> -> vector<400x256xf32>
    %cst_76 = arith.constant dense<0.000000e+00> : vector<2x256xf32>
    %110 = tpu.matmul %81, %109, %cst_76 {dimension_numbers = #tpu.dot_dimension_numbers<[1], [0], [0], [1], [0, 0, 1, 1], [], []>} : vector<2x400xf32>, vector<400x256xf32>, vector<2x256xf32> -> vector<2x256xf32>
    %111 = vector.broadcast %82 : vector<2x1xf32> to vector<2x256xf32>
    %112 = arith.addf %110, %111 : vector<2x256xf32>
    %c0_77 = arith.constant 0 : index
    %c0_78 = arith.constant 0 : index
    %113 = vector.load %arg4[%c0_77, %c0_78] : memref<256x128xf32, #tpu.memory_space<vmem>>, vector<256x128xf32>
    %cst_79 = arith.constant dense<0.000000e+00> : vector<2x128xf32>
    %114 = tpu.matmul %112, %113, %cst_79 {dimension_numbers = #tpu.dot_dimension_numbers<[1], [0], [0], [1], [0, 0, 1, 1], [], []>} : vector<2x256xf32>, vector<256x128xf32>, vector<2x128xf32> -> vector<2x128xf32>
    %115 = arith.negf %114 : vector<2x128xf32>
    %116 = math.exp %115 : vector<2x128xf32>
    %cst_80 = arith.constant 1.000000e+00 : f32
    %117 = vector.broadcast %cst_80 : f32 to vector<2x128xf32>
    %118 = arith.addf %117, %116 : vector<2x128xf32>
    %119 = arith.divf %117, %118 : vector<2x128xf32>
    %cst_81 = arith.constant dense<0.000000e+00> : vector<2x128xf32>
    %120 = tpu.matmul %119, %1, %cst_81 {dimension_numbers = #tpu.dot_dimension_numbers<[1], [0], [0], [1], [0, 0, 1, 1], [], []>} : vector<2x128xf32>, vector<128x128xf32>, vector<2x128xf32> -> vector<2x128xf32>
    %121 = math.tanh %120 : vector<2x128xf32>
    %c0_82 = arith.constant 0 : index
    %c0_83 = arith.constant 0 : index
    %c0_84 = arith.constant 0 : index
    %122 = vector.load %arg12[%c0_82, %c0_83, %c0_84] : memref<1x2x128xf32, #tpu.memory_space<vmem>>, vector<1x2x128xf32>
    %123 = vector.shape_cast %122 : vector<1x2x128xf32> to vector<2x128xf32>
    %124 = vector.shape_cast %121 : vector<2x128xf32> to vector<1x2x128xf32>
    tpu.vector_store %arg12[%c0_82, %c0_83, %c0_84], %124 {strides = array<i32>} : memref<1x2x128xf32, #tpu.memory_space<vmem>>, vector<1x2x128xf32>,
    return
  }
  func.func @transform_0(%arg0: i32) -> (i32, i32, i32) {
    %c0_i32 = arith.constant 0 : i32
    %c0_i32_0 = arith.constant 0 : i32
    %c0_i32_1 = arith.constant 0 : i32
    return %arg0, %c0_i32, %c0_i32_0 : i32, i32, i32
  }
  func.func @transform_1(%arg0: i32) -> (i32, i32, i32) {
    %c0_i32 = arith.constant 0 : i32
    %c0_i32_0 = arith.constant 0 : i32
    %c0_i32_1 = arith.constant 0 : i32
    %c0_i32_2 = arith.constant 0 : i32
    return %c0_i32, %c0_i32_0, %c0_i32_1 : i32, i32, i32
  }
  func.func @transform_2(%arg0: i32) -> (i32, i32) {
    %c0_i32 = arith.constant 0 : i32
    %c0_i32_0 = arith.constant 0 : i32
    %c0_i32_1 = arith.constant 0 : i32
    return %c0_i32, %c0_i32_0 : i32, i32
  }
  func.func @transform_3(%arg0: i32) -> (i32, i32) {
    %c0_i32 = arith.constant 0 : i32
    %c0_i32_0 = arith.constant 0 : i32
    %c0_i32_1 = arith.constant 0 : i32
    return %c0_i32, %c0_i32_0 : i32, i32
  }
  func.func @transform_4(%arg0: i32) -> (i32, i32) {
    %c0_i32 = arith.constant 0 : i32
    %c0_i32_0 = arith.constant 0 : i32
    %c0_i32_1 = arith.constant 0 : i32
    return %c0_i32, %c0_i32_0 : i32, i32
  }
  func.func @transform_5(%arg0: i32) -> (i32, i32) {
    %c0_i32 = arith.constant 0 : i32
    %c0_i32_0 = arith.constant 0 : i32
    %c0_i32_1 = arith.constant 0 : i32
    return %c0_i32, %c0_i32_0 : i32, i32
  }
  func.func @transform_6(%arg0: i32) -> (i32, i32) {
    %c0_i32 = arith.constant 0 : i32
    %c0_i32_0 = arith.constant 0 : i32
    %c0_i32_1 = arith.constant 0 : i32
    return %c0_i32, %c0_i32_0 : i32, i32
  }
  func.func @transform_7(%arg0: i32) -> (i32, i32) {
    %c0_i32 = arith.constant 0 : i32
    %c0_i32_0 = arith.constant 0 : i32
    %c0_i32_1 = arith.constant 0 : i32
    return %c0_i32, %c0_i32_0 : i32, i32
  }
  func.func @transform_8(%arg0: i32) -> (i32, i32) {
    %c0_i32 = arith.constant 0 : i32
    %c0_i32_0 = arith.constant 0 : i32
    %c0_i32_1 = arith.constant 0 : i32
    return %c0_i32, %c0_i32_0 : i32, i32
  }
  func.func @transform_9(%arg0: i32) -> (i32, i32) {
    %c0_i32 = arith.constant 0 : i32
    %c0_i32_0 = arith.constant 0 : i32
    %c0_i32_1 = arith.constant 0 : i32
    return %c0_i32, %c0_i32_0 : i32, i32
  }
  func.func @transform_10(%arg0: i32) -> (i32, i32) {
    %c0_i32 = arith.constant 0 : i32
    %c0_i32_0 = arith.constant 0 : i32
    %c0_i32_1 = arith.constant 0 : i32
    return %c0_i32, %c0_i32_0 : i32, i32
  }
  func.func @transform_11(%arg0: i32) -> (i32, i32, i32) {
    %c0_i32 = arith.constant 0 : i32
    %c0_i32_0 = arith.constant 0 : i32
    %c0_i32_1 = arith.constant 0 : i32
    return %arg0, %c0_i32, %c0_i32_0 : i32, i32, i32
  }
}

</mosaic_0001>

<llo_original>
// kernel: tpu_custom_call.1
$region0: #{tpu_custom_call.1}
  #allocation0 [shape = 'u32[]', space=smem, size = 0x4, offset = 0x4, fixed_abs, tag = 'smem constant byte address 0x4 - core index']
  #allocation1 [shape = 'u32[144,128]{1,0:T(1,128)}', space=vmem, size = 0x12000, scoped, tag = 'internal scratch']
  %s0 = inlined_call_operand.vmem [shape: f32[2,2,128], index: 0, kind: input, shape index: {}]
  %s1 = inlined_call_operand.hbm [shape: f32[2,128,128], index: 1, kind: input, shape index: {}]
  %s2 = inlined_call_operand.hbm [shape: f32[128,256], index: 2, kind: input, shape index: {}]
  %s3 = inlined_call_operand.hbm [shape: f32[256,128], index: 3, kind: input, shape index: {}]
  %s4 = inlined_call_operand.vmem [shape: f32[1,256], index: 4, kind: input, shape index: {}]
  %s5 = inlined_call_operand.vmem [shape: f32[16,200], index: 5, kind: input, shape index: {}]
  %s6 = inlined_call_operand.vmem [shape: f32[16,1], index: 6, kind: input, shape index: {}]
  %s7 = inlined_call_operand.hbm [shape: f32[16,400], index: 7, kind: input, shape index: {}]
  %s8 = inlined_call_operand.vmem [shape: f32[16,1], index: 8, kind: input, shape index: {}]
  %s9 = inlined_call_operand.vmem [shape: f32[2,400], index: 9, kind: input, shape index: {}]
  %s10 = inlined_call_operand.vmem [shape: f32[2,1], index: 10, kind: input, shape index: {}]
  %s11 = inlined_call_operand.hbm [shape: f32[2,2,128], index: 11, kind: output, shape index: {}]
  %s12 = sld [smem:[#allocation0]]
  $region93: #{tpu_custom_call.1} parent=0
    _
  %s14 = ssub.s32 1, %s12
  %s15 = scalar_select 0, %s14, %s12
  $region1: #{tpu_custom_call.1} parent=0
    #allocation2 [shape = 'u8[131072]{0}', space=vmem, size = 0x20000, scoped, tag = 'input window, operand 1, single buffered']
    #allocation3 [shape = 's32[2]{0}', space=sflag, size = 0x8, scoped, tag = 'scoped memory for tpu_custom_call.1']
    #allocation4 [shape = 's32[2]{0}', space=sflag, size = 0x8, scoped, tag = 'scoped memory for tpu_custom_call.1']
    #allocation5 [shape = 'u8[131072]{0}', space=vmem, size = 0x20000, scoped, tag = 'input window, operand 2, single buffered']
    #allocation6 [shape = 's32[1]{0}', space=sflag, size = 0x4, scoped, tag = 'scoped memory for tpu_custom_call.1']
    #allocation7 [shape = 'u8[131072]{0}', space=vmem, size = 0x20000, scoped, tag = 'input window, operand 3, single buffered']
    #allocation8 [shape = 'u8[32768]{0}', space=vmem, size = 0x8000, scoped, tag = 'input window, operand 7, single buffered']
    #allocation9 [shape = 's32[1]{0}', space=sflag, size = 0x4, scoped, tag = 'scoped memory for tpu_custom_call.1']
    #allocation10 [shape = 'u8[2048]{0}', space=vmem, size = 0x800, scoped, tag = 'output window, operand 0']
    %16 = vsyncpa [#allocation3], 0
    %17 = vsyncpa [#allocation6], 0
    %18 = vsyncpa [#allocation9], 0
    %19 = vsyncpa [#allocation4], 0
    %s20 = scalar_lea.sflag [#allocation4], 1
    %21 = vsyncpa %s20, 0
    loop: start=0, step=1, limit=4
    $region2: #{tpu_custom_call.1} parent=1 // loop_pre_header
      _
    $region3: #{tpu_custom_call.1} parent=1 // loop_header
      %s23 = sphi 0, %s27
      %p24 = scmp.ge.s32.totalorder %s23, 4
      %s33 = sphi 0, %s35
      %s36 = sphi 0, %s33
      %s37 = sphi 0, %s36
      %s53 = sphi 0, %s37
      %s57 = sphi 0, %s57
      %s59 = sphi 0, %s57
      %s60 = sphi 0, %s59
      %s74 = sphi 0, %s60
      %s78 = sphi 0, %s78
      %s80 = sphi 0, %s78
      %s81 = sphi 0, %s80
      %s95 = sphi 0, %s81
      %s99 = sphi 0, %s99
      %s101 = sphi 0, %s99
      %s102 = sphi 0, %s101
      %s116 = sphi 0, %s102
      %s120 = sphi 0, %s120
      %s122 = sphi 0, %s120
      %s123 = sphi 0, %s122
      %s137 = sphi 0, %s123
      %s141 = sphi 0, %s141
      %s143 = sphi 0, %s141
      %s144 = sphi 0, %s143
      %s158 = sphi 0, %s144
      %s162 = sphi 0, %s162
      %s164 = sphi 0, %s162
      %s165 = sphi 0, %s164
      %s179 = sphi 0, %s165
      %s183 = sphi 0, %s183
      %s185 = sphi 0, %s183
      %s186 = sphi 0, %s185
      %s200 = sphi 0, %s186
      %s204 = sphi 0, %s204
      %s206 = sphi 0, %s204
      %s207 = sphi 0, %s206
      %s221 = sphi 0, %s207
      %s225 = sphi 0, %s225
      %s227 = sphi 0, %s225
      %s228 = sphi 0, %s227
      %s242 = sphi 0, %s228
      %s246 = sphi 0, %s246
      %s248 = sphi 0, %s246
      %s249 = sphi 0, %s248
      %s263 = sphi 0, %s249
      %s269 = sphi 0, %s271
      %s272 = sphi 0, %s269
      %s273 = sphi 0, %s272
      %s289 = sphi 0, %s273
    $region4: #{tpu_custom_call.1} parent=1 // loop_header_branch
      %26 = sbr.rel (%p24) target = $region8
    $region5: #{tpu_custom_call.1} parent=1 // loop_body
      %s28 = ssub.s32 %s23, 1
      %s29 = ssub.s32 %s23, 2
      %s30 = sadd.s32 %s23, 1
      %s31 = ssub.s32 %s23, %s30
      %p32 = scmp.eq.s32.totalorder %s31, 0
      %s34 = sadd.s32 %s33, 1
      %s35 = scalar_select %p32, %s33, %s34
      %p38 = pneg %p32
      %p39 = scmp.eq.s32.totalorder %s23, 1
      %p40 = por %p38, %p39
      %p41 = scmp.ne.s32.totalorder %s33, %s36
      %p42 = scmp.eq.s32.totalorder %s23, 0
      %p43 = por %p41, %p42
      %p44 = scmp.ne.s32.totalorder %s33, %s36
      %p45 = scmp.eq.s32.totalorder %s28, 1
      %p46 = por %p44, %p45
      %p47 = scmp.ne.s32.totalorder %s36, %s37
      %p48 = scmp.eq.s32.totalorder %s28, 0
      %p49 = por %p47, %p48
      %p50 = scmp.ne.s32.totalorder %s36, %s37
      %p51 = scmp.eq.s32.totalorder %s29, 1
      %p52 = por %p50, %p51
      %p54 = scmp.ne.s32.totalorder %s37, %s53
      %p55 = scmp.eq.s32.totalorder %s29, 0
      %p56 = por %p54, %p55
      %s58 = sadd.s32 %s57, 1
      %p61 = scmp.eq.s32.totalorder %s23, 1
      %p62 = scmp.ne.s32.totalorder %s57, %s59
      %p63 = scmp.eq.s32.totalorder %s23, 0
      %p64 = por %p62, %p63
      %p65 = scmp.ne.s32.totalorder %s57, %s59
      %p66 = scmp.eq.s32.totalorder %s28, 1
      %p67 = por %p65, %p66
      %p68 = scmp.ne.s32.totalorder %s59, %s60
      %p69 = scmp.eq.s32.totalorder %s28, 0
      %p70 = por %p68, %p69
      %p71 = scmp.ne.s32.totalorder %s59, %s60
      %p72 = scmp.eq.s32.totalorder %s29, 1
      %p73 = por %p71, %p72
      %p75 = scmp.ne.s32.totalorder %s60, %s74
      %p76 = scmp.eq.s32.totalorder %s29, 0
      %p77 = por %p75, %p76
      %s79 = sadd.s32 %s78, 1
      %p82 = scmp.eq.s32.totalorder %s23, 1
      %p83 = scmp.ne.s32.totalorder %s78, %s80
      %p84 = scmp.eq.s32.totalorder %s23, 0
      %p85 = por %p83, %p84
      %p86 = scmp.ne.s32.totalorder %s78, %s80
      %p87 = scmp.eq.s32.totalorder %s28, 1
      %p88 = por %p86, %p87
      %p89 = scmp.ne.s32.totalorder %s80, %s81
      %p90 = scmp.eq.s32.totalorder %s28, 0
      %p91 = por %p89, %p90
      %p92 = scmp.ne.s32.totalorder %s80, %s81
      %p93 = scmp.eq.s32.totalorder %s29, 1
      %p94 = por %p92, %p93
      %p96 = scmp.ne.s32.totalorder %s81, %s95
      %p97 = scmp.eq.s32.totalorder %s29, 0
      %p98 = por %p96, %p97
      %s100 = sadd.s32 %s99, 1
      %p103 = scmp.eq.s32.totalorder %s23, 1
      %p104 = scmp.ne.s32.totalorder %s99, %s101
      %p105 = scmp.eq.s32.totalorder %s23, 0
      %p106 = por %p104, %p105
      %p107 = scmp.ne.s32.totalorder %s99, %s101
      %p108 = scmp.eq.s32.totalorder %s28, 1
      %p109 = por %p107, %p108
      %p110 = scmp.ne.s32.totalorder %s101, %s102
      %p111 = scmp.eq.s32.totalorder %s28, 0
      %p112 = por %p110, %p111
      %p113 = scmp.ne.s32.totalorder %s101, %s102
      %p114 = scmp.eq.s32.totalorder %s29, 1
      %p115 = por %p113, %p114
      %p117 = scmp.ne.s32.totalorder %s102, %s116
      %p118 = scmp.eq.s32.totalorder %s29, 0
      %p119 = por %p117, %p118
      %s121 = sadd.s32 %s120, 1
      %p124 = scmp.eq.s32.totalorder %s23, 1
      %p125 = scmp.ne.s32.totalorder %s120, %s122
      %p126 = scmp.eq.s32.totalorder %s23, 0
      %p127 = por %p125, %p126
      %p128 = scmp.ne.s32.totalorder %s120, %s122
      %p129 = scmp.eq.s32.totalorder %s28, 1
      %p130 = por %p128, %p129
      %p131 = scmp.ne.s32.totalorder %s122, %s123
      %p132 = scmp.eq.s32.totalorder %s28, 0
      %p133 = por %p131, %p132
      %p134 = scmp.ne.s32.totalorder %s122, %s123
      %p135 = scmp.eq.s32.totalorder %s29, 1
      %p136 = por %p134, %p135
      %p138 = scmp.ne.s32.totalorder %s123, %s137
      %p139 = scmp.eq.s32.totalorder %s29, 0
      %p140 = por %p138, %p139
      %s142 = sadd.s32 %s141, 1
      %p145 = scmp.eq.s32.totalorder %s23, 1
      %p146 = scmp.ne.s32.totalorder %s141, %s143
      %p147 = scmp.eq.s32.totalorder %s23, 0
      %p148 = por %p146, %p147
      %p149 = scmp.ne.s32.totalorder %s141, %s143
      %p150 = scmp.eq.s32.totalorder %s28, 1
      %p151 = por %p149, %p150
      %p152 = scmp.ne.s32.totalorder %s143, %s144
      %p153 = scmp.eq.s32.totalorder %s28, 0
      %p154 = por %p152, %p153
      %p155 = scmp.ne.s32.totalorder %s143, %s144
      %p156 = scmp.eq.s32.totalorder %s29, 1
      %p157 = por %p155, %p156
      %p159 = scmp.ne.s32.totalorder %s144, %s158
      %p160 = scmp.eq.s32.totalorder %s29, 0
      %p161 = por %p159, %p160
      %s163 = sadd.s32 %s162, 1
      %p166 = scmp.eq.s32.totalorder %s23, 1
      %p167 = scmp.ne.s32.totalorder %s162, %s164
      %p168 = scmp.eq.s32.totalorder %s23, 0
      %p169 = por %p167, %p168
      %p170 = scmp.ne.s32.totalorder %s162, %s164
      %p171 = scmp.eq.s32.totalorder %s28, 1
      %p172 = por %p170, %p171
      %p173 = scmp.ne.s32.totalorder %s164, %s165
      %p174 = scmp.eq.s32.totalorder %s28, 0
      %p175 = por %p173, %p174
      %p176 = scmp.ne.s32.totalorder %s164, %s165
      %p177 = scmp.eq.s32.totalorder %s29, 1
      %p178 = por %p176, %p177
      %p180 = scmp.ne.s32.totalorder %s165, %s179
      %p181 = scmp.eq.s32.totalorder %s29, 0
      %p182 = por %p180, %p181
      %s184 = sadd.s32 %s183, 1
      %p187 = scmp.eq.s32.totalorder %s23, 1
      %p188 = scmp.ne.s32.totalorder %s183, %s185
      %p189 = scmp.eq.s32.totalorder %s23, 0
      %p190 = por %p188, %p189
      %p191 = scmp.ne.s32.totalorder %s183, %s185
      %p192 = scmp.eq.s32.totalorder %s28, 1
      %p193 = por %p191, %p192
      %p194 = scmp.ne.s32.totalorder %s185, %s186
      %p195 = scmp.eq.s32.totalorder %s28, 0
      %p196 = por %p194, %p195
      %p197 = scmp.ne.s32.totalorder %s185, %s186
      %p198 = scmp.eq.s32.totalorder %s29, 1
      %p199 = por %p197, %p198
      %p201 = scmp.ne.s32.totalorder %s186, %s200
      %p202 = scmp.eq.s32.totalorder %s29, 0
      %p203 = por %p201, %p202
      %s205 = sadd.s32 %s204, 1
      %p208 = scmp.eq.s32.totalorder %s23, 1
      %p209 = scmp.ne.s32.totalorder %s204, %s206
      %p210 = scmp.eq.s32.totalorder %s23, 0
      %p211 = por %p209, %p210
      %p212 = scmp.ne.s32.totalorder %s204, %s206
      %p213 = scmp.eq.s32.totalorder %s28, 1
      %p214 = por %p212, %p213
      %p215 = scmp.ne.s32.totalorder %s206, %s207
      %p216 = scmp.eq.s32.totalorder %s28, 0
      %p217 = por %p215, %p216
      %p218 = scmp.ne.s32.totalorder %s206, %s207
      %p219 = scmp.eq.s32.totalorder %s29, 1
      %p220 = por %p218, %p219
      %p222 = scmp.ne.s32.totalorder %s207, %s221
      %p223 = scmp.eq.s32.totalorder %s29, 0
      %p224 = por %p222, %p223
      %s226 = sadd.s32 %s225, 1
      %p229 = scmp.eq.s32.totalorder %s23, 1
      %p230 = scmp.ne.s32.totalorder %s225, %s227
      %p231 = scmp.eq.s32.totalorder %s23, 0
      %p232 = por %p230, %p231
      %p233 = scmp.ne.s32.totalorder %s225, %s227
      %p234 = scmp.eq.s32.totalorder %s28, 1
      %p235 = por %p233, %p234
      %p236 = scmp.ne.s32.totalorder %s227, %s228
      %p237 = scmp.eq.s32.totalorder %s28, 0
      %p238 = por %p236, %p237
      %p239 = scmp.ne.s32.totalorder %s227, %s228
      %p240 = scmp.eq.s32.totalorder %s29, 1
      %p241 = por %p239, %p240
      %p243 = scmp.ne.s32.totalorder %s228, %s242
      %p244 = scmp.eq.s32.totalorder %s29, 0
      %p245 = por %p243, %p244
      %s247 = sadd.s32 %s246, 1
      %p250 = scmp.eq.s32.totalorder %s23, 1
      %p251 = scmp.ne.s32.totalorder %s246, %s248
      %p252 = scmp.eq.s32.totalorder %s23, 0
      %p253 = por %p251, %p252
      %p254 = scmp.ne.s32.totalorder %s246, %s248
      %p255 = scmp.eq.s32.totalorder %s28, 1
      %p256 = por %p254, %p255
      %p257 = scmp.ne.s32.totalorder %s248, %s249
      %p258 = scmp.eq.s32.totalorder %s28, 0
      %p259 = por %p257, %p258
      %p260 = scmp.ne.s32.totalorder %s248, %s249
      %p261 = scmp.eq.s32.totalorder %s29, 1
      %p262 = por %p260, %p261
      %p264 = scmp.ne.s32.totalorder %s249, %s263
      %p265 = scmp.eq.s32.totalorder %s29, 0
      %p266 = por %p264, %p265
      %s267 = ssub.s32 %s23, %s30
      %p268 = scmp.eq.s32.totalorder %s267, 0
      %s270 = sadd.s32 %s269, 1
      %s271 = scalar_select %p268, %s269, %s270
      %p274 = pneg %p268
      %p275 = scmp.eq.s32.totalorder %s23, 1
      %p276 = por %p274, %p275
      %p277 = scmp.ne.s32.totalorder %s269, %s272
      %p278 = scmp.eq.s32.totalorder %s23, 0
      %p279 = por %p277, %p278
      %p280 = scmp.ne.s32.totalorder %s269, %s272
      %p281 = scmp.eq.s32.totalorder %s28, 1
      %p282 = por %p280, %p281
      %p283 = scmp.ne.s32.totalorder %s272, %s273
      %p284 = scmp.eq.s32.totalorder %s28, 0
      %p285 = por %p283, %p284
      %p286 = scmp.ne.s32.totalorder %s272, %s273
      %p287 = scmp.eq.s32.totalorder %s29, 1
      %p288 = por %p286, %p287
      %p290 = scmp.ne.s32.totalorder %s273, %s289
      %p291 = scmp.eq.s32.totalorder %s29, 0
      %p292 = por %p290, %p291
      %p293 = scmp.le.s32.totalorder 1, %s23
      %p294 = scmp.lt.s32.totalorder %s23, 3
      %p295 = pnand %p293, %p294
      %p296 = pneg %p295
      // Predicated region
      $region9: #{tpu_custom_call.1} parent=5 // pred_check
        _
      $region10: #{tpu_custom_call.1} parent=5 // pred_check_branch
        %298 = sbr.rel (%p295) target = $region12
      $region11: #{tpu_custom_call.1} parent=5 // pred_region
        %s299 = ssub.s32 %s23, 1
        // Predicated region
        $region13: #{tpu_custom_call.1} parent=11 // pred_check
          %p300 = pneg %p70
        $region14: #{tpu_custom_call.1} parent=11 // pred_check_branch
          %302 = sbr.rel (%p300) target = $region16
        $region15: #{tpu_custom_call.1} parent=11 // pred_region
          %s304 = ssub.s32 4096, 4096
          %305 = vsyncadd [#allocation3], %s304
          %s306 = sshll.u32 [#allocation2], 4
          %s307 = int_to_ptr.vmem [resolvable:$true] %s306
          %312 = dma.hbm_to_vmem [thread:$0]  %s1, 4096, %s307, [#allocation3], 128, 128, 8
        $region16: #{tpu_custom_call.1} parent=11 // pred_fallthru
          _
        // Predicated region
        $region17: #{tpu_custom_call.1} parent=11 // pred_check
          %p313 = pneg %p91
        $region18: #{tpu_custom_call.1} parent=11 // pred_check_branch
          %315 = sbr.rel (%p313) target = $region20
        $region19: #{tpu_custom_call.1} parent=11 // pred_region
          %s317 = ssub.s32 4096, 4096
          %318 = vsyncadd [#allocation6], %s317
          %s319 = sshll.u32 [#allocation5], 4
          %s320 = int_to_ptr.vmem [resolvable:$true] %s319
          %325 = dma.hbm_to_vmem [thread:$0]  %s2, 4096, %s320, [#allocation6], 256, 256, 16
        $region20: #{tpu_custom_call.1} parent=11 // pred_fallthru
          _
        // Predicated region
        $region21: #{tpu_custom_call.1} parent=11 // pred_check
          %p326 = pneg %p112
        $region22: #{tpu_custom_call.1} parent=11 // pred_check_branch
          %328 = sbr.rel (%p326) target = $region24
        $region23: #{tpu_custom_call.1} parent=11 // pred_region
          %s330 = ssub.s32 4096, 4096
          %331 = vsyncadd [#allocation6], %s330
          %s332 = sshll.u32 [#allocation7], 4
          %s333 = int_to_ptr.vmem [resolvable:$true] %s332
          %338 = dma.hbm_to_vmem [thread:$0]  %s3, 4096, %s333, [#allocation6], 128, 128, 8
        $region24: #{tpu_custom_call.1} parent=11 // pred_fallthru
          _
        // Predicated region
        $region25: #{tpu_custom_call.1} parent=11 // pred_check
          %p339 = pneg %p133
        $region26: #{tpu_custom_call.1} parent=11 // pred_check_branch
          %341 = sbr.rel (%p339) target = $region28
        $region27: #{tpu_custom_call.1} parent=11 // pred_region
          _
        $region28: #{tpu_custom_call.1} parent=11 // pred_fallthru
          _
        // Predicated region
        $region29: #{tpu_custom_call.1} parent=11 // pred_check
          %p342 = pneg %p154
        $region30: #{tpu_custom_call.1} parent=11 // pred_check_branch
          %344 = sbr.rel (%p342) target = $region32
        $region31: #{tpu_custom_call.1} parent=11 // pred_region
          _
        $region32: #{tpu_custom_call.1} parent=11 // pred_fallthru
          _
        // Predicated region
        $region33: #{tpu_custom_call.1} parent=11 // pred_check
          %p345 = pneg %p175
        $region34: #{tpu_custom_call.1} parent=11 // pred_check_branch
          %347 = sbr.rel (%p345) target = $region36
        $region35: #{tpu_custom_call.1} parent=11 // pred_region
          _
        $region36: #{tpu_custom_call.1} parent=11 // pred_fallthru
          _
        // Predicated region
        $region37: #{tpu_custom_call.1} parent=11 // pred_check
          %p348 = pneg %p196
        $region38: #{tpu_custom_call.1} parent=11 // pred_check_branch
          %350 = sbr.rel (%p348) target = $region40
        $region39: #{tpu_custom_call.1} parent=11 // pred_region
          %s352 = ssub.s32 1024, 1024
          %353 = vsyncadd [#allocation9], %s352
          %s354 = sshll.u32 [#allocation8], 4
          %s355 = int_to_ptr.vmem [resolvable:$true] %s354
          %360 = dma.hbm_to_vmem [thread:$0]  %s7, 1024, %s355, [#allocation9], 512, 512, 32
        $region40: #{tpu_custom_call.1} parent=11 // pred_fallthru
          _
        // Predicated region
        $region41: #{tpu_custom_call.1} parent=11 // pred_check
          %p361 = pneg %p217
        $region42: #{tpu_custom_call.1} parent=11 // pred_check_branch
          %363 = sbr.rel (%p361) target = $region44
        $region43: #{tpu_custom_call.1} parent=11 // pred_region
          _
        $region44: #{tpu_custom_call.1} parent=11 // pred_fallthru
          _
        // Predicated region
        $region45: #{tpu_custom_call.1} parent=11 // pred_check
          %p364 = pneg %p238
        $region46: #{tpu_custom_call.1} parent=11 // pred_check_branch
          %366 = sbr.rel (%p364) target = $region48
        $region47: #{tpu_custom_call.1} parent=11 // pred_region
          _
        $region48: #{tpu_custom_call.1} parent=11 // pred_fallthru
          _
        // Predicated region
        $region49: #{tpu_custom_call.1} parent=11 // pred_check
          %p367 = pneg %p259
        $region50: #{tpu_custom_call.1} parent=11 // pred_check_branch
          %369 = sbr.rel (%p367) target = $region52
        $region51: #{tpu_custom_call.1} parent=11 // pred_region
          _
        $region52: #{tpu_custom_call.1} parent=11 // pred_fallthru
          _
      $region12: #{tpu_custom_call.1} parent=5 // pred_fallthru
        _
      %p370 = scmp.lt.s32.totalorder %s23, 2
      // Predicated region
      $region53: #{tpu_custom_call.1} parent=5 // pred_check
        %p371 = pneg %p370
      $region54: #{tpu_custom_call.1} parent=5 // pred_check_branch
        %373 = sbr.rel (%p371) target = $region56
      $region55: #{tpu_custom_call.1} parent=5 // pred_region
        // Predicated region
        $region57: #{tpu_custom_call.1} parent=55 // pred_check
          %p374 = pneg %p43
        $region58: #{tpu_custom_call.1} parent=55 // pred_check_branch
          %376 = sbr.rel (%p374) target = $region60
        $region59: #{tpu_custom_call.1} parent=55 // pred_region
          %p377 = scmp.lt.s32.totalorder %s23, 1
          %s378 = scalar_select %p377, %s23, 1
          %s379 = smul.addr %s378, 2
          %s380 = scalar_lea.vmem %s0, %s379
        $region60: #{tpu_custom_call.1} parent=55 // pred_fallthru
          _
      $region56: #{tpu_custom_call.1} parent=5 // pred_fallthru
        _
      %p381 = scmp.le.s32.totalorder 1, %s23
      %p382 = scmp.lt.s32.totalorder %s23, 3
      %p383 = pnand %p381, %p382
      %p384 = pneg %p383
      // Predicated region
      $region61: #{tpu_custom_call.1} parent=5 // pred_check
        _
      $region62: #{tpu_custom_call.1} parent=5 // pred_check_branch
        %386 = sbr.rel (%p383) target = $region64
      $region63: #{tpu_custom_call.1} parent=5 // pred_region
        %s387 = ssub.s32 %s23, 1
        // Predicated region
        $region65: #{tpu_custom_call.1} parent=63 // pred_check
          %p388 = pneg %p70
        $region66: #{tpu_custom_call.1} parent=63 // pred_check_branch
          %390 = sbr.rel (%p388) target = $region68
        $region67: #{tpu_custom_call.1} parent=63 // pred_region
          %391 = dma.done [#allocation3], 4096
        $region68: #{tpu_custom_call.1} parent=63 // pred_fallthru
          _
        // Predicated region
        $region69: #{tpu_custom_call.1} parent=63 // pred_check
          %p392 = pneg %p91
        $region70: #{tpu_custom_call.1} parent=63 // pred_check_branch
          %394 = sbr.rel (%p392) target = $region72
        $region71: #{tpu_custom_call.1} parent=63 // pred_region
          %395 = dma.done [#allocation6], 4096
        $region72: #{tpu_custom_call.1} parent=63 // pred_fallthru
          _
        // Predicated region
        $region73: #{tpu_custom_call.1} parent=63 // pred_check
          %p396 = pneg %p112
        $region74: #{tpu_custom_call.1} parent=63 // pred_check_branch
          %398 = sbr.rel (%p396) target = $region76
        $region75: #{tpu_custom_call.1} parent=63 // pred_region
          %399 = dma.done [#allocation6], 4096
        $region76: #{tpu_custom_call.1} parent=63 // pred_fallthru
          _
        // Predicated region
        $region77: #{tpu_custom_call.1} parent=63 // pred_check
          %p400 = pneg %p196
        $region78: #{tpu_custom_call.1} parent=63 // pred_check_branch
          %402 = sbr.rel (%p400) target = $region80
        $region79: #{tpu_custom_call.1} parent=63 // pred_region
          %403 = dma.done [#allocation9], 1024
        $region80: #{tpu_custom_call.1} parent=63 // pred_fallthru
          _
        %p404 = scmp.lt.s32.totalorder %s28, 1
        %s405 = scalar_select %p404, %s28, 1
        %s406 = smul.addr %s405, 2
        %s407 = scalar_lea.vmem %s0, %s406
        %p408 = pneg %p49
        %p409 = pneg %p46
        %p410 = pneg %p70
        %p411 = pneg %p67
        %p412 = pneg %p91
        %p413 = pneg %p88
        %p414 = pneg %p112
        %p415 = pneg %p109
        %p416 = pneg %p133
        %p417 = pneg %p130
        %p418 = pneg %p154
        %p419 = pneg %p151
        %p420 = pneg %p175
        %p421 = pneg %p172
        %p422 = pneg %p196
        %p423 = pneg %p193
        %p424 = pneg %p217
        %p425 = pneg %p214
        %p426 = pneg %p238
        %p427 = pneg %p235
        %p428 = pneg %p259
        %p429 = pneg %p256
        %p430 = pneg %p285
        %p431 = pneg %p282
        %s432 = sand.u32 %s272, 1
        %s433 = scalar_lea.sflag [#allocation4], %s432
        %s434 = sand.u32 %s272, 1
        %s435 = smul.addr %s434, 2
        %s436 = scalar_lea.vmem [#allocation10], %s435
        %p437 = scmp.lt.s32.totalorder %s28, 1
        %s438 = scalar_select %p437, %s28, 1
        %s439 = smul.addr %s438, 2
        %s440 = scalar_lea.vmem %s0, %s439
        %v441 = vld [vmem:[#allocation2] sm:$0xff]
        %v442 = vld [vmem:[#allocation2 + $0x8] sm:$0xff]
        %v443 = vld [vmem:[#allocation2 + $0x10] sm:$0xff]
        %v444 = vld [vmem:[#allocation2 + $0x18] sm:$0xff]
        %v445 = vld [vmem:[#allocation2 + $0x20] sm:$0xff]
        %v446 = vld [vmem:[#allocation2 + $0x28] sm:$0xff]
        %v447 = vld [vmem:[#allocation2 + $0x30] sm:$0xff]
        %v448 = vld [vmem:[#allocation2 + $0x38] sm:$0xff]
        %v449 = vld [vmem:[#allocation2 + $0x40] sm:$0xff]
        %v450 = vld [vmem:[#allocation2 + $0x48] sm:$0xff]
        %v451 = vld [vmem:[#allocation2 + $0x50] sm:$0xff]
        %v452 = vld [vmem:[#allocation2 + $0x58] sm:$0xff]
        %v453 = vld [vmem:[#allocation2 + $0x60] sm:$0xff]
        %v454 = vld [vmem:[#allocation2 + $0x68] sm:$0xff]
        %v455 = vld [vmem:[#allocation2 + $0x70] sm:$0xff]
        %v456 = vld [vmem:[#allocation2 + $0x78] sm:$0xff]
        %s457 = scalar_lea.vmem [#allocation2], 128
        %v458 = vld [vmem:[%s457] sm:$0xff]
        %v459 = vld [vmem:[%s457 + $0x8] sm:$0xff]
        %v460 = vld [vmem:[%s457 + $0x10] sm:$0xff]
        %v461 = vld [vmem:[%s457 + $0x18] sm:$0xff]
        %v462 = vld [vmem:[%s457 + $0x20] sm:$0xff]
        %v463 = vld [vmem:[%s457 + $0x28] sm:$0xff]
        %v464 = vld [vmem:[%s457 + $0x30] sm:$0xff]
        %v465 = vld [vmem:[%s457 + $0x38] sm:$0xff]
        %v466 = vld [vmem:[%s457 + $0x40] sm:$0xff]
        %v467 = vld [vmem:[%s457 + $0x48] sm:$0xff]
        %v468 = vld [vmem:[%s457 + $0x50] sm:$0xff]
        %v469 = vld [vmem:[%s457 + $0x58] sm:$0xff]
        %v470 = vld [vmem:[%s457 + $0x60] sm:$0xff]
        %v471 = vld [vmem:[%s457 + $0x68] sm:$0xff]
        %v472 = vld [vmem:[%s457 + $0x70] sm:$0xff]
        %v473 = vld [vmem:[%s457 + $0x78] sm:$0xff]
        %v474 = vld [vmem:[%s440] sm:$0x3]
        %475 = vmatprep.subr.mxu0 0.0
        %476 = vmatpush1.msra.mxu0 %v456
        %477 = vmatprep.subr.mxu0 0.0
        %478 = vmatpush1.msra.mxu0 %v455
        %479 = vmatprep.subr.mxu0 0.0
        %480 = vmatpush1.msra.mxu0 %v454
        %481 = vmatprep.subr.mxu0 0.0
        %482 = vmatpush1.msra.mxu0 %v453
        %483 = vmatprep.subr.mxu0 0.0
        %484 = vmatpush1.msra.mxu0 %v452
        %485 = vmatprep.subr.mxu0 0.0
        %486 = vmatpush1.msra.mxu0 %v451
        %487 = vmatprep.subr.mxu0 0.0
        %488 = vmatpush1.msra.mxu0 %v450
        %489 = vmatprep.subr.mxu0 0.0
        %490 = vmatpush1.msra.mxu0 %v449
        %491 = vmatprep.subr.mxu0 0.0
        %492 = vmatpush1.msra.mxu0 %v448
        %493 = vmatprep.subr.mxu0 0.0
        %494 = vmatpush1.msra.mxu0 %v447
        %495 = vmatprep.subr.mxu0 0.0
        %496 = vmatpush1.msra.mxu0 %v446
        %497 = vmatprep.subr.mxu0 0.0
        %498 = vmatpush1.msra.mxu0 %v445
        %499 = vmatprep.subr.mxu0 0.0
        %500 = vmatpush1.msra.mxu0 %v444
        %501 = vmatprep.subr.mxu0 0.0
        %502 = vmatpush1.msra.mxu0 %v443
        %503 = vmatprep.subr.mxu0 0.0
        %504 = vmatpush1.msra.mxu0 %v442
        %505 = vmatprep.subr.mxu0 0.0
        %506 = vmatpush1.msra.mxu0 %v441
        %507 = vmatprep.subr.mxu0 0.0
        %508 = vmatpush2.msra.mxu0 0.0
        %509 = vmatprep.subr.mxu0 0.0
        %510 = vmatpush2.msra.mxu0 0.0
        %511 = vmatprep.subr.mxu0 0.0
        %512 = vmatpush2.msra.mxu0 0.0
        %513 = vmatprep.subr.mxu0 0.0
        %514 = vmatpush2.msra.mxu0 0.0
        %515 = vmatprep.subr.mxu0 0.0
        %516 = vmatpush2.msra.mxu0 0.0
        %517 = vmatprep.subr.mxu0 0.0
        %518 = vmatpush2.msra.mxu0 0.0
        %519 = vmatprep.subr.mxu0 0.0
        %520 = vmatpush2.msra.mxu0 0.0
        %521 = vmatprep.subr.mxu0 0.0
        %522 = vmatpush2.msra.mxu0 0.0
        %523 = vmatprep.subr.mxu0 0.0
        %524 = vmatpush2.msra.mxu0 0.0
        %525 = vmatprep.subr.mxu0 0.0
        %526 = vmatpush2.msra.mxu0 0.0
        %527 = vmatprep.subr.mxu0 0.0
        %528 = vmatpush2.msra.mxu0 0.0
        %529 = vmatprep.subr.mxu0 0.0
        %530 = vmatpush2.msra.mxu0 0.0
        %531 = vmatprep.subr.mxu0 0.0
        %532 = vmatpush2.msra.mxu0 0.0
        %533 = vmatprep.subr.mxu0 0.0
        %534 = vmatpush2.msra.mxu0 0.0
        %535 = vmatprep.subr.mxu0 0.0
        %536 = vmatpush2.msra.mxu0 0.0
        %537 = vmatprep.subr.mxu0 0.0
        %538 = vmatpush2.msra.mxu0 0.0
        %539 = vmatprep.mubr.f32.mxu0 0.0
        %540 = vmatmul.mubr.f32.gmra.mxu0 %v474
        %v541 = vpop.f32.mrf.mxu0
        %v542 = vadd.f32 0.0, %v541
        %v543 = vpop.f32.mrf.mxu0
        %544 = vdwg.mxu0
        %545 = vmatprep.subr.mxu0 0.0
        %546 = vmatpush1.msra.mxu0 %v473
        %547 = vmatprep.subr.mxu0 0.0
        %548 = vmatpush1.msra.mxu0 %v472
        %549 = vmatprep.subr.mxu0 0.0
        %550 = vmatpush1.msra.mxu0 %v471
        %551 = vmatprep.subr.mxu0 0.0
        %552 = vmatpush1.msra.mxu0 %v470
        %553 = vmatprep.subr.mxu0 0.0
        %554 = vmatpush1.msra.mxu0 %v469
        %555 = vmatprep.subr.mxu0 0.0
        %556 = vmatpush1.msra.mxu0 %v468
        %557 = vmatprep.subr.mxu0 0.0
        %558 = vmatpush1.msra.mxu0 %v467
        %559 = vmatprep.subr.mxu0 0.0
        %560 = vmatpush1.msra.mxu0 %v466
        %561 = vmatprep.subr.mxu0 0.0
        %562 = vmatpush1.msra.mxu0 %v465
        %563 = vmatprep.subr.mxu0 0.0
        %564 = vmatpush1.msra.mxu0 %v464
        %565 = vmatprep.subr.mxu0 0.0
        %566 = vmatpush1.msra.mxu0 %v463
        %567 = vmatprep.subr.mxu0 0.0
        %568 = vmatpush1.msra.mxu0 %v462
        %569 = vmatprep.subr.mxu0 0.0
        %570 = vmatpush1.msra.mxu0 %v461
        %571 = vmatprep.subr.mxu0 0.0
        %572 = vmatpush1.msra.mxu0 %v460
        %573 = vmatprep.subr.mxu0 0.0
        %574 = vmatpush1.msra.mxu0 %v459
        %575 = vmatprep.subr.mxu0 0.0
        %576 = vmatpush1.msra.mxu0 %v458
        %577 = vmatprep.subr.mxu0 0.0
        %578 = vmatpush2.msra.mxu0 0.0
        %579 = vmatprep.subr.mxu0 0.0
        %580 = vmatpush2.msra.mxu0 0.0
        %581 = vmatprep.subr.mxu0 0.0
        %582 = vmatpush2.msra.mxu0 0.0
        %583 = vmatprep.subr.mxu0 0.0
        %584 = vmatpush2.msra.mxu0 0.0
        %585 = vmatprep.subr.mxu0 0.0
        %586 = vmatpush2.msra.mxu0 0.0
        %587 = vmatprep.subr.mxu0 0.0
        %588 = vmatpush2.msra.mxu0 0.0
        %589 = vmatprep.subr.mxu0 0.0
        %590 = vmatpush2.msra.mxu0 0.0
        %591 = vmatprep.subr.mxu0 0.0
        %592 = vmatpush2.msra.mxu0 0.0
        %593 = vmatprep.subr.mxu0 0.0
        %594 = vmatpush2.msra.mxu0 0.0
        %595 = vmatprep.subr.mxu0 0.0
        %596 = vmatpush2.msra.mxu0 0.0
        %597 = vmatprep.subr.mxu0 0.0
        %598 = vmatpush2.msra.mxu0 0.0
        %599 = vmatprep.subr.mxu0 0.0
        %600 = vmatpush2.msra.mxu0 0.0
        %601 = vmatprep.subr.mxu0 0.0
        %602 = vmatpush2.msra.mxu0 0.0
        %603 = vmatprep.subr.mxu0 0.0
        %604 = vmatpush2.msra.mxu0 0.0
        %605 = vmatprep.subr.mxu0 0.0
        %606 = vmatpush2.msra.mxu0 0.0
        %607 = vmatprep.subr.mxu0 0.0
        %608 = vmatpush2.msra.mxu0 0.0
        %609 = vmatprep.mubr.f32.mxu0 0.0
        %610 = vmatmul.mubr.f32.gmra.mxu0 %v474
        %v611 = vpop.f32.mrf.mxu0
        %v612 = vadd.f32 0.0, %v611
        %v613 = vpop.f32.mrf.mxu0
        %614 = vdwg.mxu0
        %v616 = vrot.slane %v542, 6
        %v619 = vrot.slane %v612, 4
        %vm621 = vcmask 1041408
        %v622 = vsel %vm621, %v474, %v616
        %vm623 = vcmask 1043456
        %v624 = vsel %vm623, %v622, %v619
        %vm625 = vcmask 1045504
        %v626 = vsel %vm625, %v624, 0.0
        %v627 = vld [vmem:[#allocation5] sm:$0xff]
        %v628 = vld [vmem:[#allocation5 + $0x8] sm:$0xff]
        %v629 = vld [vmem:[#allocation5 + $0x10] sm:$0xff]
        %v630 = vld [vmem:[#allocation5 + $0x18] sm:$0xff]
        %v631 = vld [vmem:[#allocation5 + $0x20] sm:$0xff]
        %v632 = vld [vmem:[#allocation5 + $0x28] sm:$0xff]
        %v633 = vld [vmem:[#allocation5 + $0x30] sm:$0xff]
        %v634 = vld [vmem:[#allocation5 + $0x38] sm:$0xff]
        %v635 = vld [vmem:[#allocation5 + $0x40] sm:$0xff]
        %v636 = vld [vmem:[#allocation5 + $0x48] sm:$0xff]
        %v637 = vld [vmem:[#allocation5 + $0x50] sm:$0xff]
        %v638 = vld [vmem:[#allocation5 + $0x58] sm:$0xff]
        %v639 = vld [vmem:[#allocation5 + $0x60] sm:$0xff]
        %v640 = vld [vmem:[#allocation5 + $0x68] sm:$0xff]
        %v641 = vld [vmem:[#allocation5 + $0x70] sm:$0xff]
        %v642 = vld [vmem:[#allocation5 + $0x78] sm:$0xff]
        %v643 = vld [vmem:[#allocation5 + $0x80] sm:$0xff]
        %v644 = vld [vmem:[#allocation5 + $0x88] sm:$0xff]
        %v645 = vld [vmem:[#allocation5 + $0x90] sm:$0xff]
        %v646 = vld [vmem:[#allocation5 + $0x98] sm:$0xff]
        %v647 = vld [vmem:[#allocation5 + $0xa0] sm:$0xff]
        %v648 = vld [vmem:[#allocation5 + $0xa8] sm:$0xff]
        %v649 = vld [vmem:[#allocation5 + $0xb0] sm:$0xff]
        %v650 = vld [vmem:[#allocation5 + $0xb8] sm:$0xff]
        %v651 = vld [vmem:[#allocation5 + $0xc0] sm:$0xff]
        %v652 = vld [vmem:[#allocation5 + $0xc8] sm:$0xff]
        %v653 = vld [vmem:[#allocation5 + $0xd0] sm:$0xff]
        %v654 = vld [vmem:[#allocation5 + $0xd8] sm:$0xff]
        %v655 = vld [vmem:[#allocation5 + $0xe0] sm:$0xff]
        %v656 = vld [vmem:[#allocation5 + $0xe8] sm:$0xff]
        %v657 = vld [vmem:[#allocation5 + $0xf0] sm:$0xff]
        %v658 = vld [vmem:[#allocation5 + $0xf8] sm:$0xff]
        %659 = vmatprep.subr.mxu0 %v658
        %660 = vmatpush1.msra.mxu0 %v657
        %661 = vmatprep.subr.mxu0 %v656
        %662 = vmatpush1.msra.mxu0 %v655
        %663 = vmatprep.subr.mxu0 %v654
        %664 = vmatpush1.msra.mxu0 %v653
        %665 = vmatprep.subr.mxu0 %v652
        %666 = vmatpush1.msra.mxu0 %v651
        %667 = vmatprep.subr.mxu0 %v650
        %668 = vmatpush1.msra.mxu0 %v649
        %669 = vmatprep.subr.mxu0 %v648
        %670 = vmatpush1.msra.mxu0 %v647
        %671 = vmatprep.subr.mxu0 %v646
        %672 = vmatpush1.msra.mxu0 %v645
        %673 = vmatprep.subr.mxu0 %v644
        %674 = vmatpush1.msra.mxu0 %v643
        %675 = vmatprep.subr.mxu0 %v642
        %676 = vmatpush1.msra.mxu0 %v641
        %677 = vmatprep.subr.mxu0 %v640
        %678 = vmatpush1.msra.mxu0 %v639
        %679 = vmatprep.subr.mxu0 %v638
        %680 = vmatpush1.msra.mxu0 %v637
        %681 = vmatprep.subr.mxu0 %v636
        %682 = vmatpush1.msra.mxu0 %v635
        %683 = vmatprep.subr.mxu0 %v634
        %684 = vmatpush1.msra.mxu0 %v633
        %685 = vmatprep.subr.mxu0 %v632
        %686 = vmatpush1.msra.mxu0 %v631
        %687 = vmatprep.subr.mxu0 %v630
        %688 = vmatpush1.msra.mxu0 %v629
        %689 = vmatprep.subr.mxu0 %v628
        %690 = vmatpush1.msra.mxu0 %v627
        %691 = vmatprep.subr.mxu0 0.0
        %692 = vmatpush2.msra.mxu0 0.0
        %693 = vmatprep.subr.mxu0 0.0
        %694 = vmatpush2.msra.mxu0 0.0
        %695 = vmatprep.subr.mxu0 0.0
        %696 = vmatpush2.msra.mxu0 0.0
        %697 = vmatprep.subr.mxu0 0.0
        %698 = vmatpush2.msra.mxu0 0.0
        %699 = vmatprep.subr.mxu0 0.0
        %700 = vmatpush2.msra.mxu0 0.0
        %701 = vmatprep.subr.mxu0 0.0
        %702 = vmatpush2.msra.mxu0 0.0
        %703 = vmatprep.subr.mxu0 0.0
        %704 = vmatpush2.msra.mxu0 0.0
        %705 = vmatprep.subr.mxu0 0.0
        %706 = vmatpush2.msra.mxu0 0.0
        %707 = vmatprep.subr.mxu0 0.0
        %708 = vmatpush2.msra.mxu0 0.0
        %709 = vmatprep.subr.mxu0 0.0
        %710 = vmatpush2.msra.mxu0 0.0
        %711 = vmatprep.subr.mxu0 0.0
        %712 = vmatpush2.msra.mxu0 0.0
        %713 = vmatprep.subr.mxu0 0.0
        %714 = vmatpush2.msra.mxu0 0.0
        %715 = vmatprep.subr.mxu0 0.0
        %716 = vmatpush2.msra.mxu0 0.0
        %717 = vmatprep.subr.mxu0 0.0
        %718 = vmatpush2.msra.mxu0 0.0
        %719 = vmatprep.subr.mxu0 0.0
        %720 = vmatpush2.msra.mxu0 0.0
        %721 = vmatprep.subr.mxu0 0.0
        %722 = vmatpush2.msra.mxu0 0.0
        %723 = vmatprep.mubr.f32.mxu0 0.0
        %724 = vmatmul.mubr.f32.gmra.mxu0 %v626
        %v725 = vpop.f32.mrf.mxu0
        %v726 = vadd.f32 0.0, %v725
        %v727 = vpop.f32.mrf.mxu0
        %v728 = vadd.f32 0.0, %v727
        %729 = vdwg.mxu0
        %v730 = vld [vmem:[%s4] sm:$0x3]
        %v731 = vld [vmem:[%s5] sm:$0xff]
        %v732 = vld [vmem:[%s5 + $0x8] sm:$0xff]
        %v733 = vld [vmem:[%s5 + $0x10] sm:$0xff]
        %v734 = vld [vmem:[%s5 + $0x18] sm:$0xff]
        %v735 = vld [vmem:[%s6] sm:$0xff]
        %v736 = vld [vmem:[%s6 + $0x8] sm:$0xff]
        %737 = vrot.lane.b32.xlu0 %v726, 42
        %v738 = vpop.permute.xlu0 %737
        %739 = vrot.lane.b32.xlu0 %v728, 42
        %v740 = vpop.permute.xlu0 %739
        %v741 = vlaneseq
        %v742 = vand.u32 %v741, 127
        %vm743 = vcmp.lt.s32.totalorder %v742, 42
        %v744 = vsel %vm743, %v738, %v740
        %v745 = vsel %vm743, %v740, %v738
        %746 = vrot.lane.b32.xlu0 %v726, 41
        %v747 = vpop.permute.xlu0 %746
        %748 = vrot.lane.b32.xlu0 %v728, 41
        %v749 = vpop.permute.xlu0 %748
        %vm750 = vcmp.lt.s32.totalorder %v742, 41
        %v751 = vsel %vm750, %v747, %v749
        %v752 = vsel %vm750, %v749, %v747
        %753 = vrot.lane.b32.xlu0 %v726, 40
        %v754 = vpop.permute.xlu0 %753
        %755 = vrot.lane.b32.xlu0 %v728, 40
        %v756 = vpop.permute.xlu0 %755
        %vm757 = vcmp.lt.s32.totalorder %v742, 40
        %v758 = vsel %vm757, %v754, %v756
        %v759 = vsel %vm757, %v756, %v754
        %760 = vrot.lane.b32.xlu0 %v726, 39
        %v761 = vpop.permute.xlu0 %760
        %762 = vrot.lane.b32.xlu0 %v728, 39
        %v763 = vpop.permute.xlu0 %762
        %vm764 = vcmp.lt.s32.totalorder %v742, 39
        %v765 = vsel %vm764, %v761, %v763
        %v766 = vsel %vm764, %v763, %v761
        %767 = vrot.lane.b32.xlu0 %v726, 38
        %v768 = vpop.permute.xlu0 %767
        %769 = vrot.lane.b32.xlu0 %v728, 38
        %v770 = vpop.permute.xlu0 %769
        %vm771 = vcmp.lt.s32.totalorder %v742, 38
        %v772 = vsel %vm771, %v768, %v770
        %v773 = vsel %vm771, %v770, %v768
        %774 = vrot.lane.b32.xlu0 %v726, 22
        %v775 = vpop.permute.xlu0 %774
        %776 = vrot.lane.b32.xlu0 %v728, 22
        %v777 = vpop.permute.xlu0 %776
        %vm778 = vcmp.lt.s32.totalorder %v742, 22
        %v779 = vsel %vm778, %v775, %v777
        %v780 = vsel %vm778, %v777, %v775
        %781 = vrot.lane.b32.xlu0 %v726, 21
        %v782 = vpop.permute.xlu0 %781
        %783 = vrot.lane.b32.xlu0 %v728, 21
        %v784 = vpop.permute.xlu0 %783
        %vm785 = vcmp.lt.s32.totalorder %v742, 21
        %v786 = vsel %vm785, %v782, %v784
        %v787 = vsel %vm785, %v784, %v782
        %788 = vrot.lane.b32.xlu0 %v726, 20
        %v789 = vpop.permute.xlu0 %788
        %790 = vrot.lane.b32.xlu0 %v728, 20
        %v791 = vpop.permute.xlu0 %790
        %vm792 = vcmp.lt.s32.totalorder %v742, 20
        %v793 = vsel %vm792, %v789, %v791
        %v794 = vsel %vm792, %v791, %v789
        %795 = vrot.lane.b32.xlu0 %v726, 19
        %v796 = vpop.permute.xlu0 %795
        %797 = vrot.lane.b32.xlu0 %v728, 19
        %v798 = vpop.permute.xlu0 %797
        %vm799 = vcmp.lt.s32.totalorder %v742, 19
        %v800 = vsel %vm799, %v796, %v798
        %v801 = vsel %vm799, %v798, %v796
        %802 = vrot.lane.b32.xlu0 %v726, 18
        %v803 = vpop.permute.xlu0 %802
        %804 = vrot.lane.b32.xlu0 %v728, 18
        %v805 = vpop.permute.xlu0 %804
        %vm806 = vcmp.lt.s32.totalorder %v742, 18
        %v807 = vsel %vm806, %v803, %v805
        %v808 = vsel %vm806, %v805, %v803
        %809 = vrot.lane.b32.xlu0 %v726, 2
        %v810 = vpop.permute.xlu0 %809
        %811 = vrot.lane.b32.xlu0 %v728, 2
        %v812 = vpop.permute.xlu0 %811
        %vm813 = vcmp.lt.s32.totalorder %v742, 2
        %v814 = vsel %vm813, %v810, %v812
        %v815 = vsel %vm813, %v812, %v810
        %816 = vrot.lane.b32.xlu0 %v726, 1
        %v817 = vpop.permute.xlu0 %816
        %818 = vrot.lane.b32.xlu0 %v728, 1
        %v819 = vpop.permute.xlu0 %818
        %vm820 = vcmp.lt.s32.totalorder %v742, 1
        %v821 = vsel %vm820, %v817, %v819
        %v822 = vsel %vm820, %v819, %v817
        %823 = vrot.lane.b32.xlu0 %v726, 127
        %v824 = vpop.permute.xlu0 %823
        %825 = vrot.lane.b32.xlu0 %v728, 127
        %v826 = vpop.permute.xlu0 %825
        %vm827 = vcmp.lt.s32.totalorder %v742, 127
        %v828 = vsel %vm827, %v824, %v826
        %v829 = vsel %vm827, %v826, %v824
        %830 = vrot.lane.b32.xlu0 %v726, 126
        %v831 = vpop.permute.xlu0 %830
        %832 = vrot.lane.b32.xlu0 %v728, 126
        %v833 = vpop.permute.xlu0 %832
        %vm834 = vcmp.lt.s32.totalorder %v742, 126
        %v835 = vsel %vm834, %v831, %v833
        %v836 = vsel %vm834, %v833, %v831
        %837 = vrot.lane.b32.xlu0 %v726, 110
        %v838 = vpop.permute.xlu0 %837
        %839 = vrot.lane.b32.xlu0 %v728, 110
        %v840 = vpop.permute.xlu0 %839
        %vm841 = vcmp.lt.s32.totalorder %v742, 110
        %v842 = vsel %vm841, %v838, %v840
        %v843 = vsel %vm841, %v840, %v838
        %844 = vrot.lane.b32.xlu0 %v726, 109
        %v845 = vpop.permute.xlu0 %844
        %846 = vrot.lane.b32.xlu0 %v728, 109
        %v847 = vpop.permute.xlu0 %846
        %vm848 = vcmp.lt.s32.totalorder %v742, 109
        %v849 = vsel %vm848, %v845, %v847
        %v850 = vsel %vm848, %v847, %v845
        %851 = vrot.lane.b32.xlu0 %v726, 108
        %v852 = vpop.permute.xlu0 %851
        %853 = vrot.lane.b32.xlu0 %v728, 108
        %v854 = vpop.permute.xlu0 %853
        %vm855 = vcmp.lt.s32.totalorder %v742, 108
        %v856 = vsel %vm855, %v852, %v854
        %v857 = vsel %vm855, %v854, %v852
        %858 = vrot.lane.b32.xlu0 %v726, 107
        %v859 = vpop.permute.xlu0 %858
        %860 = vrot.lane.b32.xlu0 %v728, 107
        %v861 = vpop.permute.xlu0 %860
        %vm862 = vcmp.lt.s32.totalorder %v742, 107
        %v863 = vsel %vm862, %v859, %v861
        %v864 = vsel %vm862, %v861, %v859
        %865 = vrot.lane.b32.xlu0 %v726, 106
        %v866 = vpop.permute.xlu0 %865
        %867 = vrot.lane.b32.xlu0 %v728, 106
        %v868 = vpop.permute.xlu0 %867
        %vm869 = vcmp.lt.s32.totalorder %v742, 106
        %v870 = vsel %vm869, %v866, %v868
        %v871 = vsel %vm869, %v868, %v866
        %872 = vrot.lane.b32.xlu0 %v726, 90
        %v873 = vpop.permute.xlu0 %872
        %874 = vrot.lane.b32.xlu0 %v728, 90
        %v875 = vpop.permute.xlu0 %874
        %vm876 = vcmp.lt.s32.totalorder %v742, 90
        %v877 = vsel %vm876, %v873, %v875
        %v878 = vsel %vm876, %v875, %v873
        %879 = vrot.lane.b32.xlu0 %v726, 89
        %v880 = vpop.permute.xlu0 %879
        %881 = vrot.lane.b32.xlu0 %v728, 89
        %v882 = vpop.permute.xlu0 %881
        %vm883 = vcmp.lt.s32.totalorder %v742, 89
        %v884 = vsel %vm883, %v880, %v882
        %v885 = vsel %vm883, %v882, %v880
        %886 = vrot.lane.b32.xlu0 %v726, 88
        %v887 = vpop.permute.xlu0 %886
        %888 = vrot.lane.b32.xlu0 %v728, 88
        %v889 = vpop.permute.xlu0 %888
        %vm890 = vcmp.lt.s32.totalorder %v742, 88
        %v891 = vsel %vm890, %v887, %v889
        %v892 = vsel %vm890, %v889, %v887
        %893 = vrot.lane.b32.xlu0 %v726, 87
        %v894 = vpop.permute.xlu0 %893
        %895 = vrot.lane.b32.xlu0 %v728, 87
        %v896 = vpop.permute.xlu0 %895
        %vm897 = vcmp.lt.s32.totalorder %v742, 87
        %v898 = vsel %vm897, %v894, %v896
        %v899 = vsel %vm897, %v896, %v894
        %900 = vrot.lane.b32.xlu0 %v726, 86
        %v901 = vpop.permute.xlu0 %900
        %902 = vrot.lane.b32.xlu0 %v728, 86
        %v903 = vpop.permute.xlu0 %902
        %vm904 = vcmp.lt.s32.totalorder %v742, 86
        %v905 = vsel %vm904, %v901, %v903
        %v906 = vsel %vm904, %v903, %v901
        %908 = vset.pattern.permute.xlu0 0
        %909 = vperm.xlu0 %908, %v735
        %v910 = vpop.permute.xlu0 %909
        %913 = vset.pattern.permute.xlu0 0
        %914 = vperm.xlu0 %913, %v736
        %v915 = vpop.permute.xlu0 %914
        %vm917 = vcmask 588800
        %v919 = vsel %vm917, %v732, 0
        %v922 = vsel %vm917, %v734, 0
        %924 = vmatprep.subr.mxu0 %v843
        %925 = vmatpush1.msra.mxu0 %v842
        %926 = vmatprep.subr.mxu0 %v836
        %927 = vmatpush1.msra.mxu0 %v835
        %928 = vmatprep.subr.mxu0 %v829
        %929 = vmatpush1.msra.mxu0 %v828
        %930 = vmatprep.subr.mxu0 %v728
        %931 = vmatpush1.msra.mxu0 %v726
        %932 = vmatprep.subr.mxu0 %v821
        %933 = vmatpush1.msra.mxu0 %v822
        %934 = vmatprep.subr.mxu0 %v814
        %935 = vmatpush1.msra.mxu0 %v815
        %936 = vmatprep.subr.mxu0 %v807
        %937 = vmatpush1.msra.mxu0 %v808
        %938 = vmatprep.subr.mxu0 %v800
        %939 = vmatpush1.msra.mxu0 %v801
        %940 = vmatprep.subr.mxu0 %v793
        %941 = vmatpush1.msra.mxu0 %v794
        %942 = vmatprep.subr.mxu0 %v786
        %943 = vmatpush1.msra.mxu0 %v787
        %944 = vmatprep.subr.mxu0 %v779
        %945 = vmatpush1.msra.mxu0 %v780
        %946 = vmatprep.subr.mxu0 %v772
        %947 = vmatpush1.msra.mxu0 %v773
        %948 = vmatprep.subr.mxu0 %v765
        %949 = vmatpush1.msra.mxu0 %v766
        %950 = vmatprep.subr.mxu0 %v758
        %951 = vmatpush1.msra.mxu0 %v759
        %952 = vmatprep.subr.mxu0 %v751
        %953 = vmatpush1.msra.mxu0 %v752
        %954 = vmatprep.subr.mxu0 %v744
        %955 = vmatpush1.msra.mxu0 %v745
        %956 = vmatprep.subr.mxu0 0.0
        %957 = vmatpush2.msra.mxu0 0.0
        %958 = vmatprep.subr.mxu0 0.0
        %959 = vmatpush2.msra.mxu0 0.0
        %960 = vmatprep.subr.mxu0 0.0
        %961 = vmatpush2.msra.mxu0 0.0
        %962 = vmatprep.subr.mxu0 0.0
        %963 = vmatpush2.msra.mxu0 0.0
        %964 = vmatprep.subr.mxu0 0.0
        %965 = vmatpush2.msra.mxu0 0.0
        %966 = vmatprep.subr.mxu0 0.0
        %967 = vmatpush2.msra.mxu0 0.0
        %968 = vmatprep.subr.mxu0 0.0
        %969 = vmatpush2.msra.mxu0 0.0
        %970 = vmatprep.subr.mxu0 %v906
        %971 = vmatpush2.msra.mxu0 %v905
        %972 = vmatprep.subr.mxu0 %v899
        %973 = vmatpush2.msra.mxu0 %v898
        %974 = vmatprep.subr.mxu0 %v892
        %975 = vmatpush2.msra.mxu0 %v891
        %976 = vmatprep.subr.mxu0 %v885
        %977 = vmatpush2.msra.mxu0 %v884
        %978 = vmatprep.subr.mxu0 %v878
        %979 = vmatpush2.msra.mxu0 %v877
        %980 = vmatprep.subr.mxu0 %v871
        %981 = vmatpush2.msra.mxu0 %v870
        %982 = vmatprep.subr.mxu0 %v864
        %983 = vmatpush2.msra.mxu0 %v863
        %984 = vmatprep.subr.mxu0 %v857
        %985 = vmatpush2.msra.mxu0 %v856
        %986 = vmatprep.subr.mxu0 %v850
        %987 = vmatpush2.msra.mxu0 %v849
        %988 = vmatprep.mubr.f32.mxu0 %v919
        %989 = vmatmul.mubr.f32.gmra.mxu0 %v731
        %v990 = vpop.f32.mrf.mxu0
        %v991 = vadd.f32 %v910, %v990
        %v992 = vpop.f32.mrf.mxu0
        %v993 = vadd.f32 %v910, %v992
        %994 = vmatprep.mubr.f32.mxu0 %v922
        %995 = vmatmul.mubr.f32.gmra.mxu0 %v733
        %v996 = vpop.f32.mrf.mxu0
        %v997 = vadd.f32 %v915, %v996
        %v998 = vpop.f32.mrf.mxu0
        %v999 = vadd.f32 %v915, %v998
        %1000 = vdwg.mxu0
        %v1002 = vlaneseq
        %v1003 = vshrl.u32 %v1002, 7
        %v1004 = vsub.s32 0, %v1003
        %v1005 = vrot.slane %v730, %v1004
        %v1006 = vlaneseq
        %v1007 = vshrl.u32 %v1006, 7
        %v1008 = vsub.s32 1, %v1007
        %v1009 = vrot.slane %v730, %v1008
        %v1012 = vmul.f32 %v991, %v1005
        %v1013 = vmul.f32 %v993, %v1009
        %v1014 = vmul.f32 %v997, %v1005
        %v1015 = vmul.f32 %v999, %v1009
        %v1016 = vld [vmem:[#allocation8] sm:$0xff]
        %v1017 = vld [vmem:[#allocation8 + $0x8] sm:$0xff]
        %v1018 = vld [vmem:[#allocation8 + $0x10] sm:$0xff]
        %v1019 = vld [vmem:[#allocation8 + $0x18] sm:$0xff]
        %v1020 = vld [vmem:[#allocation8 + $0x20] sm:$0xff]
        %v1021 = vld [vmem:[#allocation8 + $0x28] sm:$0xff]
        %v1022 = vld [vmem:[#allocation8 + $0x30] sm:$0xff]
        %v1023 = vld [vmem:[#allocation8 + $0x38] sm:$0xff]
        %v1024 = vld [vmem:[%s8] sm:$0xff]
        %v1025 = vld [vmem:[%s8 + $0x8] sm:$0xff]
        %1026 = vrot.lane.b32.xlu0 %v1012, 42
        %v1027 = vpop.permute.xlu0 %1026
        %1028 = vrot.lane.b32.xlu0 %v1014, 42
        %v1029 = vpop.permute.xlu0 %1028
        %1030 = vrot.lane.b32.xlu0 %v1013, 42
        %v1031 = vpop.permute.xlu0 %1030
        %1032 = vrot.lane.b32.xlu0 %v1015, 42
        %v1033 = vpop.permute.xlu0 %1032
        %v1034 = vsel %vm743, %v1027, %v1031
        %v1035 = vsel %vm743, %v1029, %v1033
        %v1036 = vsel %vm743, %v1031, %v1027
        %v1037 = vsel %vm743, %v1033, %v1029
        %1038 = vrot.lane.b32.xlu0 %v1012, 41
        %v1039 = vpop.permute.xlu0 %1038
        %1040 = vrot.lane.b32.xlu0 %v1014, 41
        %v1041 = vpop.permute.xlu0 %1040
        %1042 = vrot.lane.b32.xlu0 %v1013, 41
        %v1043 = vpop.permute.xlu0 %1042
        %1044 = vrot.lane.b32.xlu0 %v1015, 41
        %v1045 = vpop.permute.xlu0 %1044
        %v1046 = vsel %vm750, %v1039, %v1043
        %v1047 = vsel %vm750, %v1041, %v1045
        %v1048 = vsel %vm750, %v1043, %v1039
        %v1049 = vsel %vm750, %v1045, %v1041
        %1050 = vrot.lane.b32.xlu0 %v1012, 40
        %v1051 = vpop.permute.xlu0 %1050
        %1052 = vrot.lane.b32.xlu0 %v1014, 40
        %v1053 = vpop.permute.xlu0 %1052
        %1054 = vrot.lane.b32.xlu0 %v1013, 40
        %v1055 = vpop.permute.xlu0 %1054
        %1056 = vrot.lane.b32.xlu0 %v1015, 40
        %v1057 = vpop.permute.xlu0 %1056
        %v1058 = vsel %vm757, %v1051, %v1055
        %v1059 = vsel %vm757, %v1053, %v1057
        %v1060 = vsel %vm757, %v1055, %v1051
        %v1061 = vsel %vm757, %v1057, %v1053
        %1062 = vrot.lane.b32.xlu0 %v1012, 39
        %v1063 = vpop.permute.xlu0 %1062
        %1064 = vrot.lane.b32.xlu0 %v1014, 39
        %v1065 = vpop.permute.xlu0 %1064
        %1066 = vrot.lane.b32.xlu0 %v1013, 39
        %v1067 = vpop.permute.xlu0 %1066
        %1068 = vrot.lane.b32.xlu0 %v1015, 39
        %v1069 = vpop.permute.xlu0 %1068
        %v1070 = vsel %vm764, %v1063, %v1067
        %v1071 = vsel %vm764, %v1065, %v1069
        %v1072 = vsel %vm764, %v1067, %v1063
        %v1073 = vsel %vm764, %v1069, %v1065
        %1074 = vrot.lane.b32.xlu0 %v1012, 38
        %v1075 = vpop.permute.xlu0 %1074
        %1076 = vrot.lane.b32.xlu0 %v1014, 38
        %v1077 = vpop.permute.xlu0 %1076
        %1078 = vrot.lane.b32.xlu0 %v1013, 38
        %v1079 = vpop.permute.xlu0 %1078
        %1080 = vrot.lane.b32.xlu0 %v1015, 38
        %v1081 = vpop.permute.xlu0 %1080
        %v1082 = vsel %vm771, %v1075, %v1079
        %v1083 = vsel %vm771, %v1077, %v1081
        %v1084 = vsel %vm771, %v1079, %v1075
        %v1085 = vsel %vm771, %v1081, %v1077
        %1086 = vrot.lane.b32.xlu0 %v1012, 22
        %v1087 = vpop.permute.xlu0 %1086
        %1088 = vrot.lane.b32.xlu0 %v1014, 22
        %v1089 = vpop.permute.xlu0 %1088
        %1090 = vrot.lane.b32.xlu0 %v1013, 22
        %v1091 = vpop.permute.xlu0 %1090
        %1092 = vrot.lane.b32.xlu0 %v1015, 22
        %v1093 = vpop.permute.xlu0 %1092
        %v1094 = vsel %vm778, %v1087, %v1091
        %v1095 = vsel %vm778, %v1089, %v1093
        %v1096 = vsel %vm778, %v1091, %v1087
        %v1097 = vsel %vm778, %v1093, %v1089
        %1098 = vrot.lane.b32.xlu0 %v1012, 21
        %v1099 = vpop.permute.xlu0 %1098
        %1100 = vrot.lane.b32.xlu0 %v1014, 21
        %v1101 = vpop.permute.xlu0 %1100
        %1102 = vrot.lane.b32.xlu0 %v1013, 21
        %v1103 = vpop.permute.xlu0 %1102
        %1104 = vrot.lane.b32.xlu0 %v1015, 21
        %v1105 = vpop.permute.xlu0 %1104
        %v1106 = vsel %vm785, %v1099, %v1103
        %v1107 = vsel %vm785, %v1101, %v1105
        %v1108 = vsel %vm785, %v1103, %v1099
        %v1109 = vsel %vm785, %v1105, %v1101
        %1110 = vrot.lane.b32.xlu0 %v1012, 20
        %v1111 = vpop.permute.xlu0 %1110
        %1112 = vrot.lane.b32.xlu0 %v1014, 20
        %v1113 = vpop.permute.xlu0 %1112
        %1114 = vrot.lane.b32.xlu0 %v1013, 20
        %v1115 = vpop.permute.xlu0 %1114
        %1116 = vrot.lane.b32.xlu0 %v1015, 20
        %v1117 = vpop.permute.xlu0 %1116
        %v1118 = vsel %vm792, %v1111, %v1115
        %v1119 = vsel %vm792, %v1113, %v1117
        %v1120 = vsel %vm792, %v1115, %v1111
        %v1121 = vsel %vm792, %v1117, %v1113
        %1122 = vrot.lane.b32.xlu0 %v1012, 19
        %v1123 = vpop.permute.xlu0 %1122
        %1124 = vrot.lane.b32.xlu0 %v1014, 19
        %v1125 = vpop.permute.xlu0 %1124
        %1126 = vrot.lane.b32.xlu0 %v1013, 19
        %v1127 = vpop.permute.xlu0 %1126
        %1128 = vrot.lane.b32.xlu0 %v1015, 19
        %v1129 = vpop.permute.xlu0 %1128
        %v1130 = vsel %vm799, %v1123, %v1127
        %v1131 = vsel %vm799, %v1125, %v1129
        %v1132 = vsel %vm799, %v1127, %v1123
        %v1133 = vsel %vm799, %v1129, %v1125
        %1134 = vrot.lane.b32.xlu0 %v1012, 18
        %v1135 = vpop.permute.xlu0 %1134
        %1136 = vrot.lane.b32.xlu0 %v1014, 18
        %v1137 = vpop.permute.xlu0 %1136
        %1138 = vrot.lane.b32.xlu0 %v1013, 18
        %v1139 = vpop.permute.xlu0 %1138
        %1140 = vrot.lane.b32.xlu0 %v1015, 18
        %v1141 = vpop.permute.xlu0 %1140
        %v1142 = vsel %vm806, %v1135, %v1139
        %v1143 = vsel %vm806, %v1137, %v1141
        %v1144 = vsel %vm806, %v1139, %v1135
        %v1145 = vsel %vm806, %v1141, %v1137
        %1146 = vrot.lane.b32.xlu0 %v1012, 2
        %v1147 = vpop.permute.xlu0 %1146
        %1148 = vrot.lane.b32.xlu0 %v1014, 2
        %v1149 = vpop.permute.xlu0 %1148
        %1150 = vrot.lane.b32.xlu0 %v1013, 2
        %v1151 = vpop.permute.xlu0 %1150
        %1152 = vrot.lane.b32.xlu0 %v1015, 2
        %v1153 = vpop.permute.xlu0 %1152
        %v1154 = vsel %vm813, %v1147, %v1151
        %v1155 = vsel %vm813, %v1149, %v1153
        %v1156 = vsel %vm813, %v1151, %v1147
        %v1157 = vsel %vm813, %v1153, %v1149
        %1158 = vrot.lane.b32.xlu0 %v1012, 1
        %v1159 = vpop.permute.xlu0 %1158
        %1160 = vrot.lane.b32.xlu0 %v1014, 1
        %v1161 = vpop.permute.xlu0 %1160
        %1162 = vrot.lane.b32.xlu0 %v1013, 1
        %v1163 = vpop.permute.xlu0 %1162
        %1164 = vrot.lane.b32.xlu0 %v1015, 1
        %v1165 = vpop.permute.xlu0 %1164
        %v1166 = vsel %vm820, %v1159, %v1163
        %v1167 = vsel %vm820, %v1161, %v1165
        %v1168 = vsel %vm820, %v1163, %v1159
        %v1169 = vsel %vm820, %v1165, %v1161
        %1170 = vrot.lane.b32.xlu0 %v1012, 127
        %v1171 = vpop.permute.xlu0 %1170
        %1172 = vrot.lane.b32.xlu0 %v1014, 127
        %v1173 = vpop.permute.xlu0 %1172
        %1174 = vrot.lane.b32.xlu0 %v1013, 127
        %v1175 = vpop.permute.xlu0 %1174
        %1176 = vrot.lane.b32.xlu0 %v1015, 127
        %v1177 = vpop.permute.xlu0 %1176
        %v1178 = vsel %vm827, %v1171, %v1175
        %v1179 = vsel %vm827, %v1173, %v1177
        %v1180 = vsel %vm827, %v1175, %v1171
        %v1181 = vsel %vm827, %v1177, %v1173
        %1182 = vrot.lane.b32.xlu0 %v1012, 126
        %v1183 = vpop.permute.xlu0 %1182
        %1184 = vrot.lane.b32.xlu0 %v1014, 126
        %v1185 = vpop.permute.xlu0 %1184
        %1186 = vrot.lane.b32.xlu0 %v1013, 126
        %v1187 = vpop.permute.xlu0 %1186
        %1188 = vrot.lane.b32.xlu0 %v1015, 126
        %v1189 = vpop.permute.xlu0 %1188
        %v1190 = vsel %vm834, %v1183, %v1187
        %v1191 = vsel %vm834, %v1185, %v1189
        %v1192 = vsel %vm834, %v1187, %v1183
        %v1193 = vsel %vm834, %v1189, %v1185
        %1194 = vrot.lane.b32.xlu0 %v1012, 110
        %v1195 = vpop.permute.xlu0 %1194
        %1196 = vrot.lane.b32.xlu0 %v1014, 110
        %v1197 = vpop.permute.xlu0 %1196
        %1198 = vrot.lane.b32.xlu0 %v1013, 110
        %v1199 = vpop.permute.xlu0 %1198
        %1200 = vrot.lane.b32.xlu0 %v1015, 110
        %v1201 = vpop.permute.xlu0 %1200
        %v1202 = vsel %vm841, %v1195, %v1199
        %v1203 = vsel %vm841, %v1197, %v1201
        %v1204 = vsel %vm841, %v1199, %v1195
        %v1205 = vsel %vm841, %v1201, %v1197
        %1206 = vrot.lane.b32.xlu0 %v1012, 109
        %v1207 = vpop.permute.xlu0 %1206
        %1208 = vrot.lane.b32.xlu0 %v1014, 109
        %v1209 = vpop.permute.xlu0 %1208
        %1210 = vrot.lane.b32.xlu0 %v1013, 109
        %v1211 = vpop.permute.xlu0 %1210
        %1212 = vrot.lane.b32.xlu0 %v1015, 109
        %v1213 = vpop.permute.xlu0 %1212
        %v1214 = vsel %vm848, %v1207, %v1211
        %v1215 = vsel %vm848, %v1209, %v1213
        %v1216 = vsel %vm848, %v1211, %v1207
        %v1217 = vsel %vm848, %v1213, %v1209
        %1218 = vrot.lane.b32.xlu0 %v1012, 108
        %v1219 = vpop.permute.xlu0 %1218
        %1220 = vrot.lane.b32.xlu0 %v1014, 108
        %v1221 = vpop.permute.xlu0 %1220
        %1222 = vrot.lane.b32.xlu0 %v1013, 108
        %v1223 = vpop.permute.xlu0 %1222
        %1224 = vrot.lane.b32.xlu0 %v1015, 108
        %v1225 = vpop.permute.xlu0 %1224
        %v1226 = vsel %vm855, %v1219, %v1223
        %v1227 = vsel %vm855, %v1221, %v1225
        %v1228 = vsel %vm855, %v1223, %v1219
        %v1229 = vsel %vm855, %v1225, %v1221
        %1230 = vrot.lane.b32.xlu0 %v1012, 107
        %v1231 = vpop.permute.xlu0 %1230
        %1232 = vrot.lane.b32.xlu0 %v1014, 107
        %v1233 = vpop.permute.xlu0 %1232
        %1234 = vrot.lane.b32.xlu0 %v1013, 107
        %v1235 = vpop.permute.xlu0 %1234
        %1236 = vrot.lane.b32.xlu0 %v1015, 107
        %v1237 = vpop.permute.xlu0 %1236
        %v1238 = vsel %vm862, %v1231, %v1235
        %v1239 = vsel %vm862, %v1233, %v1237
        %v1240 = vsel %vm862, %v1235, %v1231
        %v1241 = vsel %vm862, %v1237, %v1233
        %1242 = vrot.lane.b32.xlu0 %v1012, 106
        %v1243 = vpop.permute.xlu0 %1242
        %1244 = vrot.lane.b32.xlu0 %v1014, 106
        %v1245 = vpop.permute.xlu0 %1244
        %1246 = vrot.lane.b32.xlu0 %v1013, 106
        %v1247 = vpop.permute.xlu0 %1246
        %1248 = vrot.lane.b32.xlu0 %v1015, 106
        %v1249 = vpop.permute.xlu0 %1248
        %v1250 = vsel %vm869, %v1243, %v1247
        %v1251 = vsel %vm869, %v1245, %v1249
        %v1252 = vsel %vm869, %v1247, %v1243
        %v1253 = vsel %vm869, %v1249, %v1245
        %1254 = vrot.lane.b32.xlu0 %v1012, 90
        %v1255 = vpop.permute.xlu0 %1254
        %1256 = vrot.lane.b32.xlu0 %v1014, 90
        %v1257 = vpop.permute.xlu0 %1256
        %1258 = vrot.lane.b32.xlu0 %v1013, 90
        %v1259 = vpop.permute.xlu0 %1258
        %1260 = vrot.lane.b32.xlu0 %v1015, 90
        %v1261 = vpop.permute.xlu0 %1260
        %v1262 = vsel %vm876, %v1255, %v1259
        %v1263 = vsel %vm876, %v1257, %v1261
        %v1264 = vsel %vm876, %v1259, %v1255
        %v1265 = vsel %vm876, %v1261, %v1257
        %1266 = vrot.lane.b32.xlu0 %v1012, 89
        %v1267 = vpop.permute.xlu0 %1266
        %1268 = vrot.lane.b32.xlu0 %v1014, 89
        %v1269 = vpop.permute.xlu0 %1268
        %1270 = vrot.lane.b32.xlu0 %v1013, 89
        %v1271 = vpop.permute.xlu0 %1270
        %1272 = vrot.lane.b32.xlu0 %v1015, 89
        %v1273 = vpop.permute.xlu0 %1272
        %v1274 = vsel %vm883, %v1267, %v1271
        %v1275 = vsel %vm883, %v1269, %v1273
        %v1276 = vsel %vm883, %v1271, %v1267
        %v1277 = vsel %vm883, %v1273, %v1269
        %1278 = vrot.lane.b32.xlu0 %v1012, 88
        %v1279 = vpop.permute.xlu0 %1278
        %1280 = vrot.lane.b32.xlu0 %v1014, 88
        %v1281 = vpop.permute.xlu0 %1280
        %1282 = vrot.lane.b32.xlu0 %v1013, 88
        %v1283 = vpop.permute.xlu0 %1282
        %1284 = vrot.lane.b32.xlu0 %v1015, 88
        %v1285 = vpop.permute.xlu0 %1284
        %v1286 = vsel %vm890, %v1279, %v1283
        %v1287 = vsel %vm890, %v1281, %v1285
        %v1288 = vsel %vm890, %v1283, %v1279
        %v1289 = vsel %vm890, %v1285, %v1281
        %1290 = vrot.lane.b32.xlu0 %v1012, 87
        %v1291 = vpop.permute.xlu0 %1290
        %1292 = vrot.lane.b32.xlu0 %v1014, 87
        %v1293 = vpop.permute.xlu0 %1292
        %1294 = vrot.lane.b32.xlu0 %v1013, 87
        %v1295 = vpop.permute.xlu0 %1294
        %1296 = vrot.lane.b32.xlu0 %v1015, 87
        %v1297 = vpop.permute.xlu0 %1296
        %v1298 = vsel %vm897, %v1291, %v1295
        %v1299 = vsel %vm897, %v1293, %v1297
        %v1300 = vsel %vm897, %v1295, %v1291
        %v1301 = vsel %vm897, %v1297, %v1293
        %1302 = vrot.lane.b32.xlu0 %v1012, 86
        %v1303 = vpop.permute.xlu0 %1302
        %1304 = vrot.lane.b32.xlu0 %v1014, 86
        %v1305 = vpop.permute.xlu0 %1304
        %1306 = vrot.lane.b32.xlu0 %v1013, 86
        %v1307 = vpop.permute.xlu0 %1306
        %1308 = vrot.lane.b32.xlu0 %v1015, 86
        %v1309 = vpop.permute.xlu0 %1308
        %v1310 = vsel %vm904, %v1303, %v1307
        %v1311 = vsel %vm904, %v1305, %v1309
        %v1312 = vsel %vm904, %v1307, %v1303
        %v1313 = vsel %vm904, %v1309, %v1305
        %1315 = vset.pattern.permute.xlu0 0
        %1316 = vperm.xlu0 %1315, %v1024
        %v1317 = vpop.permute.xlu0 %1316
        %1320 = vset.pattern.permute.xlu0 0
        %1321 = vperm.xlu0 %1320, %v1025
        %v1322 = vpop.permute.xlu0 %1321
        %vm1324 = vcmask 130048
        %v1326 = vsel %vm1324, %v1019, 0
        %v1329 = vsel %vm1324, %v1023, 0
        %1331 = vmatprep.subr.mxu0 %v1119
        %1332 = vmatpush1.msra.mxu0 %v1121
        %1333 = vmatprep.subr.mxu0 %v1118
        %1334 = vmatpush1.msra.mxu0 %v1120
        %1335 = vmatprep.subr.mxu0 %v1107
        %1336 = vmatpush1.msra.mxu0 %v1109
        %1337 = vmatprep.subr.mxu0 %v1106
        %1338 = vmatpush1.msra.mxu0 %v1108
        %1339 = vmatprep.subr.mxu0 %v1095
        %1340 = vmatpush1.msra.mxu0 %v1097
        %1341 = vmatprep.subr.mxu0 %v1094
        %1342 = vmatpush1.msra.mxu0 %v1096
        %1343 = vmatprep.subr.mxu0 %v1083
        %1344 = vmatpush1.msra.mxu0 %v1085
        %1345 = vmatprep.subr.mxu0 %v1082
        %1346 = vmatpush1.msra.mxu0 %v1084
        %1347 = vmatprep.subr.mxu0 %v1071
        %1348 = vmatpush1.msra.mxu0 %v1073
        %1349 = vmatprep.subr.mxu0 %v1070
        %1350 = vmatpush1.msra.mxu0 %v1072
        %1351 = vmatprep.subr.mxu0 %v1059
        %1352 = vmatpush1.msra.mxu0 %v1061
        %1353 = vmatprep.subr.mxu0 %v1058
        %1354 = vmatpush1.msra.mxu0 %v1060
        %1355 = vmatprep.subr.mxu0 %v1047
        %1356 = vmatpush1.msra.mxu0 %v1049
        %1357 = vmatprep.subr.mxu0 %v1046
        %1358 = vmatpush1.msra.mxu0 %v1048
        %1359 = vmatprep.subr.mxu0 %v1035
        %1360 = vmatpush1.msra.mxu0 %v1037
        %1361 = vmatprep.subr.mxu0 %v1034
        %1362 = vmatpush1.msra.mxu0 %v1036
        %1363 = vmatprep.subr.mxu0 %v1205
        %1364 = vmatpush2.msra.mxu0 %v1203
        %1365 = vmatprep.subr.mxu0 %v1204
        %1366 = vmatpush2.msra.mxu0 %v1202
        %1367 = vmatprep.subr.mxu0 %v1193
        %1368 = vmatpush2.msra.mxu0 %v1191
        %1369 = vmatprep.subr.mxu0 %v1192
        %1370 = vmatpush2.msra.mxu0 %v1190
        %1371 = vmatprep.subr.mxu0 %v1181
        %1372 = vmatpush2.msra.mxu0 %v1179
        %1373 = vmatprep.subr.mxu0 %v1180
        %1374 = vmatpush2.msra.mxu0 %v1178
        %1375 = vmatprep.subr.mxu0 %v1015
        %1376 = vmatpush2.msra.mxu0 %v1014
        %1377 = vmatprep.subr.mxu0 %v1013
        %1378 = vmatpush2.msra.mxu0 %v1012
        %1379 = vmatprep.subr.mxu0 %v1167
        %1380 = vmatpush2.msra.mxu0 %v1169
        %1381 = vmatprep.subr.mxu0 %v1166
        %1382 = vmatpush2.msra.mxu0 %v1168
        %1383 = vmatprep.subr.mxu0 %v1155
        %1384 = vmatpush2.msra.mxu0 %v1157
        %1385 = vmatprep.subr.mxu0 %v1154
        %1386 = vmatpush2.msra.mxu0 %v1156
        %1387 = vmatprep.subr.mxu0 %v1143
        %1388 = vmatpush2.msra.mxu0 %v1145
        %1389 = vmatprep.subr.mxu0 %v1142
        %1390 = vmatpush2.msra.mxu0 %v1144
        %1391 = vmatprep.subr.mxu0 %v1131
        %1392 = vmatpush2.msra.mxu0 %v1133
        %1393 = vmatprep.subr.mxu0 %v1130
        %1394 = vmatpush2.msra.mxu0 %v1132
        %1395 = vmatprep.mubr.f32.mxu0 %v1017
        %1396 = vmatmul.mubr.f32.gmra.mxu0 %v1016
        %v1397 = vpop.f32.mrf.mxu0
        %v1398 = vadd.f32 %v1317, %v1397
        %v1399 = vpop.f32.mrf.mxu0
        %v1400 = vadd.f32 %v1317, %v1399
        %1401 = vmatprep.mubr.f32.mxu0 %v1021
        %1402 = vmatmul.mubr.f32.gmra.mxu0 %v1020
        %v1403 = vpop.f32.mrf.mxu0
        %v1404 = vadd.f32 %v1322, %v1403
        %v1405 = vpop.f32.mrf.mxu0
        %v1406 = vadd.f32 %v1322, %v1405
        %1407 = vdwg.mxu0
        %1408 = vmatprep.subr.mxu0 %v1301
        %1409 = vmatpush1.msra.mxu0 %v1299
        %1410 = vmatprep.subr.mxu0 %v1300
        %1411 = vmatpush1.msra.mxu0 %v1298
        %1412 = vmatprep.subr.mxu0 %v1289
        %1413 = vmatpush1.msra.mxu0 %v1287
        %1414 = vmatprep.subr.mxu0 %v1288
        %1415 = vmatpush1.msra.mxu0 %v1286
        %1416 = vmatprep.subr.mxu0 %v1277
        %1417 = vmatpush1.msra.mxu0 %v1275
        %1418 = vmatprep.subr.mxu0 %v1276
        %1419 = vmatpush1.msra.mxu0 %v1274
        %1420 = vmatprep.subr.mxu0 %v1265
        %1421 = vmatpush1.msra.mxu0 %v1263
        %1422 = vmatprep.subr.mxu0 %v1264
        %1423 = vmatpush1.msra.mxu0 %v1262
        %1424 = vmatprep.subr.mxu0 %v1253
        %1425 = vmatpush1.msra.mxu0 %v1251
        %1426 = vmatprep.subr.mxu0 %v1252
        %1427 = vmatpush1.msra.mxu0 %v1250
        %1428 = vmatprep.subr.mxu0 %v1241
        %1429 = vmatpush1.msra.mxu0 %v1239
        %1430 = vmatprep.subr.mxu0 %v1240
        %1431 = vmatpush1.msra.mxu0 %v1238
        %1432 = vmatprep.subr.mxu0 %v1229
        %1433 = vmatpush1.msra.mxu0 %v1227
        %1434 = vmatprep.subr.mxu0 %v1228
        %1435 = vmatpush1.msra.mxu0 %v1226
        %1436 = vmatprep.subr.mxu0 %v1217
        %1437 = vmatpush1.msra.mxu0 %v1215
        %1438 = vmatprep.subr.mxu0 %v1216
        %1439 = vmatpush1.msra.mxu0 %v1214
        %1440 = vmatprep.subr.mxu0 0.0
        %1441 = vmatpush2.msra.mxu0 0.0
        %1442 = vmatprep.subr.mxu0 0.0
        %1443 = vmatpush2.msra.mxu0 0.0
        %1444 = vmatprep.subr.mxu0 0.0
        %1445 = vmatpush2.msra.mxu0 0.0
        %1446 = vmatprep.subr.mxu0 0.0
        %1447 = vmatpush2.msra.mxu0 0.0
        %1448 = vmatprep.subr.mxu0 0.0
        %1449 = vmatpush2.msra.mxu0 0.0
        %1450 = vmatprep.subr.mxu0 0.0
        %1451 = vmatpush2.msra.mxu0 0.0
        %1452 = vmatprep.subr.mxu0 0.0
        %1453 = vmatpush2.msra.mxu0 0.0
        %1454 = vmatprep.subr.mxu0 0.0
        %1455 = vmatpush2.msra.mxu0 0.0
        %1456 = vmatprep.subr.mxu0 0.0
        %1457 = vmatpush2.msra.mxu0 0.0
        %1458 = vmatprep.subr.mxu0 0.0
        %1459 = vmatpush2.msra.mxu0 0.0
        %1460 = vmatprep.subr.mxu0 0.0
        %1461 = vmatpush2.msra.mxu0 0.0
        %1462 = vmatprep.subr.mxu0 0.0
        %1463 = vmatpush2.msra.mxu0 0.0
        %1464 = vmatprep.subr.mxu0 0.0
        %1465 = vmatpush2.msra.mxu0 0.0
        %1466 = vmatprep.subr.mxu0 0.0
        %1467 = vmatpush2.msra.mxu0 0.0
        %1468 = vmatprep.subr.mxu0 %v1313
        %1469 = vmatpush2.msra.mxu0 %v1311
        %1470 = vmatprep.subr.mxu0 %v1312
        %1471 = vmatpush2.msra.mxu0 %v1310
        %1472 = vmatprep.mubr.f32.mxu0 %v1326
        %1473 = vmatmul.mubr.f32.gmra.mxu0 %v1018
        %v1474 = vpop.f32.mrf.mxu0
        %v1475 = vadd.f32 %v1398, %v1474
        %v1476 = vpop.f32.mrf.mxu0
        %v1477 = vadd.f32 %v1400, %v1476
        %1478 = vmatprep.mubr.f32.mxu0 %v1329
        %1479 = vmatmul.mubr.f32.gmra.mxu0 %v1022
        %v1480 = vpop.f32.mrf.mxu0
        %v1481 = vadd.f32 %v1404, %v1480
        %v1482 = vpop.f32.mrf.mxu0
        %v1483 = vadd.f32 %v1406, %v1482
        %1484 = vdwg.mxu0
        %v1485 = vmul.f32 %v1475, %v1005
        %v1486 = vmul.f32 %v1477, %v1009
        %v1487 = vmul.f32 %v1481, %v1005
        %v1488 = vmul.f32 %v1483, %v1009
        %v1489 = vld [vmem:[%s9] sm:$0xff]
        %v1490 = vld [vmem:[%s10] sm:$0x3]
        %1491 = vrot.lane.b32.xlu0 %v1485, 42
        %v1492 = vpop.permute.xlu0 %1491
        %1493 = vrot.lane.b32.xlu0 %v1487, 42
        %v1494 = vpop.permute.xlu0 %1493
        %1495 = vrot.lane.b32.xlu0 %v1486, 42
        %v1496 = vpop.permute.xlu0 %1495
        %1497 = vrot.lane.b32.xlu0 %v1488, 42
        %v1498 = vpop.permute.xlu0 %1497
        %v1499 = vsel %vm743, %v1492, %v1496
        %v1500 = vsel %vm743, %v1494, %v1498
        %v1501 = vsel %vm743, %v1496, %v1492
        %v1502 = vsel %vm743, %v1498, %v1494
        %1503 = vrot.lane.b32.xlu0 %v1485, 41
        %v1504 = vpop.permute.xlu0 %1503
        %1505 = vrot.lane.b32.xlu0 %v1487, 41
        %v1506 = vpop.permute.xlu0 %1505
        %1507 = vrot.lane.b32.xlu0 %v1486, 41
        %v1508 = vpop.permute.xlu0 %1507
        %1509 = vrot.lane.b32.xlu0 %v1488, 41
        %v1510 = vpop.permute.xlu0 %1509
        %v1511 = vsel %vm750, %v1504, %v1508
        %v1512 = vsel %vm750, %v1506, %v1510
        %v1513 = vsel %vm750, %v1508, %v1504
        %v1514 = vsel %vm750, %v1510, %v1506
        %1515 = vrot.lane.b32.xlu0 %v1485, 40
        %v1516 = vpop.permute.xlu0 %1515
        %1517 = vrot.lane.b32.xlu0 %v1487, 40
        %v1518 = vpop.permute.xlu0 %1517
        %1519 = vrot.lane.b32.xlu0 %v1486, 40
        %v1520 = vpop.permute.xlu0 %1519
        %1521 = vrot.lane.b32.xlu0 %v1488, 40
        %v1522 = vpop.permute.xlu0 %1521
        %v1523 = vsel %vm757, %v1516, %v1520
        %v1524 = vsel %vm757, %v1518, %v1522
        %v1525 = vsel %vm757, %v1520, %v1516
        %v1526 = vsel %vm757, %v1522, %v1518
        %1527 = vrot.lane.b32.xlu0 %v1485, 39
        %v1528 = vpop.permute.xlu0 %1527
        %1529 = vrot.lane.b32.xlu0 %v1487, 39
        %v1530 = vpop.permute.xlu0 %1529
        %1531 = vrot.lane.b32.xlu0 %v1486, 39
        %v1532 = vpop.permute.xlu0 %1531
        %1533 = vrot.lane.b32.xlu0 %v1488, 39
        %v1534 = vpop.permute.xlu0 %1533
        %v1535 = vsel %vm764, %v1528, %v1532
        %v1536 = vsel %vm764, %v1530, %v1534
        %v1537 = vsel %vm764, %v1532, %v1528
        %v1538 = vsel %vm764, %v1534, %v1530
        %1539 = vrot.lane.b32.xlu0 %v1485, 38
        %v1540 = vpop.permute.xlu0 %1539
        %1541 = vrot.lane.b32.xlu0 %v1487, 38
        %v1542 = vpop.permute.xlu0 %1541
        %1543 = vrot.lane.b32.xlu0 %v1486, 38
        %v1544 = vpop.permute.xlu0 %1543
        %1545 = vrot.lane.b32.xlu0 %v1488, 38
        %v1546 = vpop.permute.xlu0 %1545
        %v1547 = vsel %vm771, %v1540, %v1544
        %v1548 = vsel %vm771, %v1542, %v1546
        %v1549 = vsel %vm771, %v1544, %v1540
        %v1550 = vsel %vm771, %v1546, %v1542
        %1551 = vrot.lane.b32.xlu0 %v1485, 22
        %v1552 = vpop.permute.xlu0 %1551
        %1553 = vrot.lane.b32.xlu0 %v1487, 22
        %v1554 = vpop.permute.xlu0 %1553
        %1555 = vrot.lane.b32.xlu0 %v1486, 22
        %v1556 = vpop.permute.xlu0 %1555
        %1557 = vrot.lane.b32.xlu0 %v1488, 22
        %v1558 = vpop.permute.xlu0 %1557
        %v1559 = vsel %vm778, %v1552, %v1556
        %v1560 = vsel %vm778, %v1554, %v1558
        %v1561 = vsel %vm778, %v1556, %v1552
        %v1562 = vsel %vm778, %v1558, %v1554
        %1563 = vrot.lane.b32.xlu0 %v1485, 21
        %v1564 = vpop.permute.xlu0 %1563
        %1565 = vrot.lane.b32.xlu0 %v1487, 21
        %v1566 = vpop.permute.xlu0 %1565
        %1567 = vrot.lane.b32.xlu0 %v1486, 21
        %v1568 = vpop.permute.xlu0 %1567
        %1569 = vrot.lane.b32.xlu0 %v1488, 21
        %v1570 = vpop.permute.xlu0 %1569
        %v1571 = vsel %vm785, %v1564, %v1568
        %v1572 = vsel %vm785, %v1566, %v1570
        %v1573 = vsel %vm785, %v1568, %v1564
        %v1574 = vsel %vm785, %v1570, %v1566
        %1575 = vrot.lane.b32.xlu0 %v1485, 20
        %v1576 = vpop.permute.xlu0 %1575
        %1577 = vrot.lane.b32.xlu0 %v1487, 20
        %v1578 = vpop.permute.xlu0 %1577
        %1579 = vrot.lane.b32.xlu0 %v1486, 20
        %v1580 = vpop.permute.xlu0 %1579
        %1581 = vrot.lane.b32.xlu0 %v1488, 20
        %v1582 = vpop.permute.xlu0 %1581
        %v1583 = vsel %vm792, %v1576, %v1580
        %v1584 = vsel %vm792, %v1578, %v1582
        %v1585 = vsel %vm792, %v1580, %v1576
        %v1586 = vsel %vm792, %v1582, %v1578
        %1587 = vrot.lane.b32.xlu0 %v1485, 19
        %v1588 = vpop.permute.xlu0 %1587
        %1589 = vrot.lane.b32.xlu0 %v1487, 19
        %v1590 = vpop.permute.xlu0 %1589
        %1591 = vrot.lane.b32.xlu0 %v1486, 19
        %v1592 = vpop.permute.xlu0 %1591
        %1593 = vrot.lane.b32.xlu0 %v1488, 19
        %v1594 = vpop.permute.xlu0 %1593
        %v1595 = vsel %vm799, %v1588, %v1592
        %v1596 = vsel %vm799, %v1590, %v1594
        %v1597 = vsel %vm799, %v1592, %v1588
        %v1598 = vsel %vm799, %v1594, %v1590
        %1599 = vrot.lane.b32.xlu0 %v1485, 18
        %v1600 = vpop.permute.xlu0 %1599
        %1601 = vrot.lane.b32.xlu0 %v1487, 18
        %v1602 = vpop.permute.xlu0 %1601
        %1603 = vrot.lane.b32.xlu0 %v1486, 18
        %v1604 = vpop.permute.xlu0 %1603
        %1605 = vrot.lane.b32.xlu0 %v1488, 18
        %v1606 = vpop.permute.xlu0 %1605
        %v1607 = vsel %vm806, %v1600, %v1604
        %v1608 = vsel %vm806, %v1602, %v1606
        %v1609 = vsel %vm806, %v1604, %v1600
        %v1610 = vsel %vm806, %v1606, %v1602
        %1611 = vrot.lane.b32.xlu0 %v1485, 2
        %v1612 = vpop.permute.xlu0 %1611
        %1613 = vrot.lane.b32.xlu0 %v1487, 2
        %v1614 = vpop.permute.xlu0 %1613
        %1615 = vrot.lane.b32.xlu0 %v1486, 2
        %v1616 = vpop.permute.xlu0 %1615
        %1617 = vrot.lane.b32.xlu0 %v1488, 2
        %v1618 = vpop.permute.xlu0 %1617
        %v1619 = vsel %vm813, %v1612, %v1616
        %v1620 = vsel %vm813, %v1614, %v1618
        %v1621 = vsel %vm813, %v1616, %v1612
        %v1622 = vsel %vm813, %v1618, %v1614
        %1623 = vrot.lane.b32.xlu0 %v1485, 1
        %v1624 = vpop.permute.xlu0 %1623
        %1625 = vrot.lane.b32.xlu0 %v1487, 1
        %v1626 = vpop.permute.xlu0 %1625
        %1627 = vrot.lane.b32.xlu0 %v1486, 1
        %v1628 = vpop.permute.xlu0 %1627
        %1629 = vrot.lane.b32.xlu0 %v1488, 1
        %v1630 = vpop.permute.xlu0 %1629
        %v1631 = vsel %vm820, %v1624, %v1628
        %v1632 = vsel %vm820, %v1626, %v1630
        %v1633 = vsel %vm820, %v1628, %v1624
        %v1634 = vsel %vm820, %v1630, %v1626
        %1635 = vrot.lane.b32.xlu0 %v1485, 127
        %v1636 = vpop.permute.xlu0 %1635
        %1637 = vrot.lane.b32.xlu0 %v1487, 127
        %v1638 = vpop.permute.xlu0 %1637
        %1639 = vrot.lane.b32.xlu0 %v1486, 127
        %v1640 = vpop.permute.xlu0 %1639
        %1641 = vrot.lane.b32.xlu0 %v1488, 127
        %v1642 = vpop.permute.xlu0 %1641
        %v1643 = vsel %vm827, %v1636, %v1640
        %v1644 = vsel %vm827, %v1638, %v1642
        %v1645 = vsel %vm827, %v1640, %v1636
        %v1646 = vsel %vm827, %v1642, %v1638
        %1647 = vrot.lane.b32.xlu0 %v1485, 126
        %v1648 = vpop.permute.xlu0 %1647
        %1649 = vrot.lane.b32.xlu0 %v1487, 126
        %v1650 = vpop.permute.xlu0 %1649
        %1651 = vrot.lane.b32.xlu0 %v1486, 126
        %v1652 = vpop.permute.xlu0 %1651
        %1653 = vrot.lane.b32.xlu0 %v1488, 126
        %v1654 = vpop.permute.xlu0 %1653
        %v1655 = vsel %vm834, %v1648, %v1652
        %v1656 = vsel %vm834, %v1650, %v1654
        %v1657 = vsel %vm834, %v1652, %v1648
        %v1658 = vsel %vm834, %v1654, %v1650
        %1659 = vrot.lane.b32.xlu0 %v1485, 110
        %v1660 = vpop.permute.xlu0 %1659
        %1661 = vrot.lane.b32.xlu0 %v1487, 110
        %v1662 = vpop.permute.xlu0 %1661
        %1663 = vrot.lane.b32.xlu0 %v1486, 110
        %v1664 = vpop.permute.xlu0 %1663
        %1665 = vrot.lane.b32.xlu0 %v1488, 110
        %v1666 = vpop.permute.xlu0 %1665
        %v1667 = vsel %vm841, %v1660, %v1664
        %v1668 = vsel %vm841, %v1662, %v1666
        %v1669 = vsel %vm841, %v1664, %v1660
        %v1670 = vsel %vm841, %v1666, %v1662
        %1671 = vrot.lane.b32.xlu0 %v1485, 109
        %v1672 = vpop.permute.xlu0 %1671
        %1673 = vrot.lane.b32.xlu0 %v1487, 109
        %v1674 = vpop.permute.xlu0 %1673
        %1675 = vrot.lane.b32.xlu0 %v1486, 109
        %v1676 = vpop.permute.xlu0 %1675
        %1677 = vrot.lane.b32.xlu0 %v1488, 109
        %v1678 = vpop.permute.xlu0 %1677
        %v1679 = vsel %vm848, %v1672, %v1676
        %v1680 = vsel %vm848, %v1674, %v1678
        %v1681 = vsel %vm848, %v1676, %v1672
        %v1682 = vsel %vm848, %v1678, %v1674
        %1683 = vrot.lane.b32.xlu0 %v1485, 108
        %v1684 = vpop.permute.xlu0 %1683
        %1685 = vrot.lane.b32.xlu0 %v1487, 108
        %v1686 = vpop.permute.xlu0 %1685
        %1687 = vrot.lane.b32.xlu0 %v1486, 108
        %v1688 = vpop.permute.xlu0 %1687
        %1689 = vrot.lane.b32.xlu0 %v1488, 108
        %v1690 = vpop.permute.xlu0 %1689
        %v1691 = vsel %vm855, %v1684, %v1688
        %v1692 = vsel %vm855, %v1686, %v1690
        %v1693 = vsel %vm855, %v1688, %v1684
        %v1694 = vsel %vm855, %v1690, %v1686
        %1695 = vrot.lane.b32.xlu0 %v1485, 107
        %v1696 = vpop.permute.xlu0 %1695
        %1697 = vrot.lane.b32.xlu0 %v1487, 107
        %v1698 = vpop.permute.xlu0 %1697
        %1699 = vrot.lane.b32.xlu0 %v1486, 107
        %v1700 = vpop.permute.xlu0 %1699
        %1701 = vrot.lane.b32.xlu0 %v1488, 107
        %v1702 = vpop.permute.xlu0 %1701
        %v1703 = vsel %vm862, %v1696, %v1700
        %v1704 = vsel %vm862, %v1698, %v1702
        %v1705 = vsel %vm862, %v1700, %v1696
        %v1706 = vsel %vm862, %v1702, %v1698
        %1707 = vrot.lane.b32.xlu0 %v1485, 106
        %v1708 = vpop.permute.xlu0 %1707
        %1709 = vrot.lane.b32.xlu0 %v1487, 106
        %v1710 = vpop.permute.xlu0 %1709
        %1711 = vrot.lane.b32.xlu0 %v1486, 106
        %v1712 = vpop.permute.xlu0 %1711
        %1713 = vrot.lane.b32.xlu0 %v1488, 106
        %v1714 = vpop.permute.xlu0 %1713
        %v1715 = vsel %vm869, %v1708, %v1712
        %v1716 = vsel %vm869, %v1710, %v1714
        %v1717 = vsel %vm869, %v1712, %v1708
        %v1718 = vsel %vm869, %v1714, %v1710
        %1719 = vrot.lane.b32.xlu0 %v1485, 90
        %v1720 = vpop.permute.xlu0 %1719
        %1721 = vrot.lane.b32.xlu0 %v1487, 90
        %v1722 = vpop.permute.xlu0 %1721
        %1723 = vrot.lane.b32.xlu0 %v1486, 90
        %v1724 = vpop.permute.xlu0 %1723
        %1725 = vrot.lane.b32.xlu0 %v1488, 90
        %v1726 = vpop.permute.xlu0 %1725
        %v1727 = vsel %vm876, %v1720, %v1724
        %v1728 = vsel %vm876, %v1722, %v1726
        %v1729 = vsel %vm876, %v1724, %v1720
        %v1730 = vsel %vm876, %v1726, %v1722
        %1731 = vrot.lane.b32.xlu0 %v1485, 89
        %v1732 = vpop.permute.xlu0 %1731
        %1733 = vrot.lane.b32.xlu0 %v1487, 89
        %v1734 = vpop.permute.xlu0 %1733
        %1735 = vrot.lane.b32.xlu0 %v1486, 89
        %v1736 = vpop.permute.xlu0 %1735
        %1737 = vrot.lane.b32.xlu0 %v1488, 89
        %v1738 = vpop.permute.xlu0 %1737
        %v1739 = vsel %vm883, %v1732, %v1736
        %v1740 = vsel %vm883, %v1734, %v1738
        %v1741 = vsel %vm883, %v1736, %v1732
        %v1742 = vsel %vm883, %v1738, %v1734
        %1743 = vrot.lane.b32.xlu0 %v1485, 88
        %v1744 = vpop.permute.xlu0 %1743
        %1745 = vrot.lane.b32.xlu0 %v1487, 88
        %v1746 = vpop.permute.xlu0 %1745
        %1747 = vrot.lane.b32.xlu0 %v1486, 88
        %v1748 = vpop.permute.xlu0 %1747
        %1749 = vrot.lane.b32.xlu0 %v1488, 88
        %v1750 = vpop.permute.xlu0 %1749
        %v1751 = vsel %vm890, %v1744, %v1748
        %v1752 = vsel %vm890, %v1746, %v1750
        %v1753 = vsel %vm890, %v1748, %v1744
        %v1754 = vsel %vm890, %v1750, %v1746
        %1755 = vrot.lane.b32.xlu0 %v1485, 87
        %v1756 = vpop.permute.xlu0 %1755
        %1757 = vrot.lane.b32.xlu0 %v1487, 87
        %v1758 = vpop.permute.xlu0 %1757
        %1759 = vrot.lane.b32.xlu0 %v1486, 87
        %v1760 = vpop.permute.xlu0 %1759
        %1761 = vrot.lane.b32.xlu0 %v1488, 87
        %v1762 = vpop.permute.xlu0 %1761
        %v1763 = vsel %vm897, %v1756, %v1760
        %v1764 = vsel %vm897, %v1758, %v1762
        %v1765 = vsel %vm897, %v1760, %v1756
        %v1766 = vsel %vm897, %v1762, %v1758
        %1767 = vrot.lane.b32.xlu0 %v1485, 86
        %v1768 = vpop.permute.xlu0 %1767
        %1769 = vrot.lane.b32.xlu0 %v1487, 86
        %v1770 = vpop.permute.xlu0 %1769
        %1771 = vrot.lane.b32.xlu0 %v1486, 86
        %v1772 = vpop.permute.xlu0 %1771
        %1773 = vrot.lane.b32.xlu0 %v1488, 86
        %v1774 = vpop.permute.xlu0 %1773
        %v1775 = vsel %vm904, %v1768, %v1772
        %v1776 = vsel %vm904, %v1770, %v1774
        %v1777 = vsel %vm904, %v1772, %v1768
        %v1778 = vsel %vm904, %v1774, %v1770
        %1780 = vset.pattern.permute.xlu0 0
        %1781 = vperm.xlu0 %1780, %v1490
        %v1782 = vpop.permute.xlu0 %1781
        %v1785 = vcombine.high %v1489, %v1489
        %v1787 = vunpack.c.l.s4 1983009808
        %v1788 = vunpack.c.0.s8 %v1787
        %v1789 = vlaneseq
        %v1790 = vshrl.u32 %v1789, 7
        %v1791 = vsub.s32 %v1788, %v1790
        %v1792 = vrot.slane %v1489, %v1791
        %v1794 = vunpack.c.l.s4 1983009808
        %v1795 = vunpack.c.0.s8 %v1794
        %v1796 = vlaneseq
        %v1797 = vshrl.u32 %v1796, 7
        %v1798 = vsub.s32 %v1795, %v1797
        %v1799 = vrot.slane %v1785, %v1798
        %v1800 = vcombine.high %v1792, %v1792
        %v1801 = vcombine.high %v1799, %v1799
        %v1805 = vsel %vm1324, %v1801, 0
        %1807 = vmatprep.subr.mxu0 %v1584
        %1808 = vmatpush1.msra.mxu0 %v1586
        %1809 = vmatprep.subr.mxu0 %v1583
        %1810 = vmatpush1.msra.mxu0 %v1585
        %1811 = vmatprep.subr.mxu0 %v1572
        %1812 = vmatpush1.msra.mxu0 %v1574
        %1813 = vmatprep.subr.mxu0 %v1571
        %1814 = vmatpush1.msra.mxu0 %v1573
        %1815 = vmatprep.subr.mxu0 %v1560
        %1816 = vmatpush1.msra.mxu0 %v1562
        %1817 = vmatprep.subr.mxu0 %v1559
        %1818 = vmatpush1.msra.mxu0 %v1561
        %1819 = vmatprep.subr.mxu0 %v1548
        %1820 = vmatpush1.msra.mxu0 %v1550
        %1821 = vmatprep.subr.mxu0 %v1547
        %1822 = vmatpush1.msra.mxu0 %v1549
        %1823 = vmatprep.subr.mxu0 %v1536
        %1824 = vmatpush1.msra.mxu0 %v1538
        %1825 = vmatprep.subr.mxu0 %v1535
        %1826 = vmatpush1.msra.mxu0 %v1537
        %1827 = vmatprep.subr.mxu0 %v1524
        %1828 = vmatpush1.msra.mxu0 %v1526
        %1829 = vmatprep.subr.mxu0 %v1523
        %1830 = vmatpush1.msra.mxu0 %v1525
        %1831 = vmatprep.subr.mxu0 %v1512
        %1832 = vmatpush1.msra.mxu0 %v1514
        %1833 = vmatprep.subr.mxu0 %v1511
        %1834 = vmatpush1.msra.mxu0 %v1513
        %1835 = vmatprep.subr.mxu0 %v1500
        %1836 = vmatpush1.msra.mxu0 %v1502
        %1837 = vmatprep.subr.mxu0 %v1499
        %1838 = vmatpush1.msra.mxu0 %v1501
        %1839 = vmatprep.subr.mxu0 %v1670
        %1840 = vmatpush2.msra.mxu0 %v1668
        %1841 = vmatprep.subr.mxu0 %v1669
        %1842 = vmatpush2.msra.mxu0 %v1667
        %1843 = vmatprep.subr.mxu0 %v1658
        %1844 = vmatpush2.msra.mxu0 %v1656
        %1845 = vmatprep.subr.mxu0 %v1657
        %1846 = vmatpush2.msra.mxu0 %v1655
        %1847 = vmatprep.subr.mxu0 %v1646
        %1848 = vmatpush2.msra.mxu0 %v1644
        %1849 = vmatprep.subr.mxu0 %v1645
        %1850 = vmatpush2.msra.mxu0 %v1643
        %1851 = vmatprep.subr.mxu0 %v1488
        %1852 = vmatpush2.msra.mxu0 %v1487
        %1853 = vmatprep.subr.mxu0 %v1486
        %1854 = vmatpush2.msra.mxu0 %v1485
        %1855 = vmatprep.subr.mxu0 %v1632
        %1856 = vmatpush2.msra.mxu0 %v1634
        %1857 = vmatprep.subr.mxu0 %v1631
        %1858 = vmatpush2.msra.mxu0 %v1633
        %1859 = vmatprep.subr.mxu0 %v1620
        %1860 = vmatpush2.msra.mxu0 %v1622
        %1861 = vmatprep.subr.mxu0 %v1619
        %1862 = vmatpush2.msra.mxu0 %v1621
        %1863 = vmatprep.subr.mxu0 %v1608
        %1864 = vmatpush2.msra.mxu0 %v1610
        %1865 = vmatprep.subr.mxu0 %v1607
        %1866 = vmatpush2.msra.mxu0 %v1609
        %1867 = vmatprep.subr.mxu0 %v1596
        %1868 = vmatpush2.msra.mxu0 %v1598
        %1869 = vmatprep.subr.mxu0 %v1595
        %1870 = vmatpush2.msra.mxu0 %v1597
        %1871 = vmatprep.mubr.f32.mxu0 %v1800
        %1872 = vmatmul.mubr.f32.gmra.mxu0 %v1792
        %v1873 = vpop.f32.mrf.mxu0
        %v1874 = vadd.f32 %v1782, %v1873
        %v1875 = vpop.f32.mrf.mxu0
        %v1876 = vadd.f32 %v1782, %v1875
        %1877 = vdwg.mxu0
        %1878 = vmatprep.subr.mxu0 %v1766
        %1879 = vmatpush1.msra.mxu0 %v1764
        %1880 = vmatprep.subr.mxu0 %v1765
        %1881 = vmatpush1.msra.mxu0 %v1763
        %1882 = vmatprep.subr.mxu0 %v1754
        %1883 = vmatpush1.msra.mxu0 %v1752
        %1884 = vmatprep.subr.mxu0 %v1753
        %1885 = vmatpush1.msra.mxu0 %v1751
        %1886 = vmatprep.subr.mxu0 %v1742
        %1887 = vmatpush1.msra.mxu0 %v1740
        %1888 = vmatprep.subr.mxu0 %v1741
        %1889 = vmatpush1.msra.mxu0 %v1739
        %1890 = vmatprep.subr.mxu0 %v1730
        %1891 = vmatpush1.msra.mxu0 %v1728
        %1892 = vmatprep.subr.mxu0 %v1729
        %1893 = vmatpush1.msra.mxu0 %v1727
        %1894 = vmatprep.subr.mxu0 %v1718
        %1895 = vmatpush1.msra.mxu0 %v1716
        %1896 = vmatprep.subr.mxu0 %v1717
        %1897 = vmatpush1.msra.mxu0 %v1715
        %1898 = vmatprep.subr.mxu0 %v1706
        %1899 = vmatpush1.msra.mxu0 %v1704
        %1900 = vmatprep.subr.mxu0 %v1705
        %1901 = vmatpush1.msra.mxu0 %v1703
        %1902 = vmatprep.subr.mxu0 %v1694
        %1903 = vmatpush1.msra.mxu0 %v1692
        %1904 = vmatprep.subr.mxu0 %v1693
        %1905 = vmatpush1.msra.mxu0 %v1691
        %1906 = vmatprep.subr.mxu0 %v1682
        %1907 = vmatpush1.msra.mxu0 %v1680
        %1908 = vmatprep.subr.mxu0 %v1681
        %1909 = vmatpush1.msra.mxu0 %v1679
        %1910 = vmatprep.subr.mxu0 0.0
        %1911 = vmatpush2.msra.mxu0 0.0
        %1912 = vmatprep.subr.mxu0 0.0
        %1913 = vmatpush2.msra.mxu0 0.0
        %1914 = vmatprep.subr.mxu0 0.0
        %1915 = vmatpush2.msra.mxu0 0.0
        %1916 = vmatprep.subr.mxu0 0.0
        %1917 = vmatpush2.msra.mxu0 0.0
        %1918 = vmatprep.subr.mxu0 0.0
        %1919 = vmatpush2.msra.mxu0 0.0
        %1920 = vmatprep.subr.mxu0 0.0
        %1921 = vmatpush2.msra.mxu0 0.0
        %1922 = vmatprep.subr.mxu0 0.0
        %1923 = vmatpush2.msra.mxu0 0.0
        %1924 = vmatprep.subr.mxu0 0.0
        %1925 = vmatpush2.msra.mxu0 0.0
        %1926 = vmatprep.subr.mxu0 0.0
        %1927 = vmatpush2.msra.mxu0 0.0
        %1928 = vmatprep.subr.mxu0 0.0
        %1929 = vmatpush2.msra.mxu0 0.0
        %1930 = vmatprep.subr.mxu0 0.0
        %1931 = vmatpush2.msra.mxu0 0.0
        %1932 = vmatprep.subr.mxu0 0.0
        %1933 = vmatpush2.msra.mxu0 0.0
        %1934 = vmatprep.subr.mxu0 0.0
        %1935 = vmatpush2.msra.mxu0 0.0
        %1936 = vmatprep.subr.mxu0 0.0
        %1937 = vmatpush2.msra.mxu0 0.0
        %1938 = vmatprep.subr.mxu0 %v1778
        %1939 = vmatpush2.msra.mxu0 %v1776
        %1940 = vmatprep.subr.mxu0 %v1777
        %1941 = vmatpush2.msra.mxu0 %v1775
        %1942 = vmatprep.mubr.f32.mxu0 %v1805
        %1943 = vmatmul.mubr.f32.gmra.mxu0 %v1799
        %v1944 = vpop.f32.mrf.mxu0
        %v1945 = vadd.f32 %v1874, %v1944
        %v1946 = vpop.f32.mrf.mxu0
        %v1947 = vadd.f32 %v1876, %v1946
        %1948 = vdwg.mxu0
        %v1949 = vld [vmem:[#allocation7] sm:$0xff]
        %v1950 = vld [vmem:[#allocation7 + $0x8] sm:$0xff]
        %v1951 = vld [vmem:[#allocation7 + $0x10] sm:$0xff]
        %v1952 = vld [vmem:[#allocation7 + $0x18] sm:$0xff]
        %v1953 = vld [vmem:[#allocation7 + $0x20] sm:$0xff]
        %v1954 = vld [vmem:[#allocation7 + $0x28] sm:$0xff]
        %v1955 = vld [vmem:[#allocation7 + $0x30] sm:$0xff]
        %v1956 = vld [vmem:[#allocation7 + $0x38] sm:$0xff]
        %v1957 = vld [vmem:[#allocation7 + $0x40] sm:$0xff]
        %v1958 = vld [vmem:[#allocation7 + $0x48] sm:$0xff]
        %v1959 = vld [vmem:[#allocation7 + $0x50] sm:$0xff]
        %v1960 = vld [vmem:[#allocation7 + $0x58] sm:$0xff]
        %v1961 = vld [vmem:[#allocation7 + $0x60] sm:$0xff]
        %v1962 = vld [vmem:[#allocation7 + $0x68] sm:$0xff]
        %v1963 = vld [vmem:[#allocation7 + $0x70] sm:$0xff]
        %v1964 = vld [vmem:[#allocation7 + $0x78] sm:$0xff]
        %v1965 = vld [vmem:[#allocation7 + $0x80] sm:$0xff]
        %v1966 = vld [vmem:[#allocation7 + $0x88] sm:$0xff]
        %v1967 = vld [vmem:[#allocation7 + $0x90] sm:$0xff]
        %v1968 = vld [vmem:[#allocation7 + $0x98] sm:$0xff]
        %v1969 = vld [vmem:[#allocation7 + $0xa0] sm:$0xff]
        %v1970 = vld [vmem:[#allocation7 + $0xa8] sm:$0xff]
        %v1971 = vld [vmem:[#allocation7 + $0xb0] sm:$0xff]
        %v1972 = vld [vmem:[#allocation7 + $0xb8] sm:$0xff]
        %v1973 = vld [vmem:[#allocation7 + $0xc0] sm:$0xff]
        %v1974 = vld [vmem:[#allocation7 + $0xc8] sm:$0xff]
        %v1975 = vld [vmem:[#allocation7 + $0xd0] sm:$0xff]
        %v1976 = vld [vmem:[#allocation7 + $0xd8] sm:$0xff]
        %v1977 = vld [vmem:[#allocation7 + $0xe0] sm:$0xff]
        %v1978 = vld [vmem:[#allocation7 + $0xe8] sm:$0xff]
        %v1979 = vld [vmem:[#allocation7 + $0xf0] sm:$0xff]
        %v1980 = vld [vmem:[#allocation7 + $0xf8] sm:$0xff]
        %1981 = vmatprep.subr.mxu0 0.0
        %1982 = vmatpush1.msra.mxu0 %v1964
        %1983 = vmatprep.subr.mxu0 0.0
        %1984 = vmatpush1.msra.mxu0 %v1963
        %1985 = vmatprep.subr.mxu0 0.0
        %1986 = vmatpush1.msra.mxu0 %v1962
        %1987 = vmatprep.subr.mxu0 0.0
        %1988 = vmatpush1.msra.mxu0 %v1961
        %1989 = vmatprep.subr.mxu0 0.0
        %1990 = vmatpush1.msra.mxu0 %v1960
        %1991 = vmatprep.subr.mxu0 0.0
        %1992 = vmatpush1.msra.mxu0 %v1959
        %1993 = vmatprep.subr.mxu0 0.0
        %1994 = vmatpush1.msra.mxu0 %v1958
        %1995 = vmatprep.subr.mxu0 0.0
        %1996 = vmatpush1.msra.mxu0 %v1957
        %1997 = vmatprep.subr.mxu0 0.0
        %1998 = vmatpush1.msra.mxu0 %v1956
        %1999 = vmatprep.subr.mxu0 0.0
        %2000 = vmatpush1.msra.mxu0 %v1955
        %2001 = vmatprep.subr.mxu0 0.0
        %2002 = vmatpush1.msra.mxu0 %v1954
        %2003 = vmatprep.subr.mxu0 0.0
        %2004 = vmatpush1.msra.mxu0 %v1953
        %2005 = vmatprep.subr.mxu0 0.0
        %2006 = vmatpush1.msra.mxu0 %v1952
        %2007 = vmatprep.subr.mxu0 0.0
        %2008 = vmatpush1.msra.mxu0 %v1951
        %2009 = vmatprep.subr.mxu0 0.0
        %2010 = vmatpush1.msra.mxu0 %v1950
        %2011 = vmatprep.subr.mxu0 0.0
        %2012 = vmatpush1.msra.mxu0 %v1949
        %2013 = vmatprep.subr.mxu0 0.0
        %2014 = vmatpush2.msra.mxu0 %v1980
        %2015 = vmatprep.subr.mxu0 0.0
        %2016 = vmatpush2.msra.mxu0 %v1979
        %2017 = vmatprep.subr.mxu0 0.0
        %2018 = vmatpush2.msra.mxu0 %v1978
        %2019 = vmatprep.subr.mxu0 0.0
        %2020 = vmatpush2.msra.mxu0 %v1977
        %2021 = vmatprep.subr.mxu0 0.0
        %2022 = vmatpush2.msra.mxu0 %v1976
        %2023 = vmatprep.subr.mxu0 0.0
        %2024 = vmatpush2.msra.mxu0 %v1975
        %2025 = vmatprep.subr.mxu0 0.0
        %2026 = vmatpush2.msra.mxu0 %v1974
        %2027 = vmatprep.subr.mxu0 0.0
        %2028 = vmatpush2.msra.mxu0 %v1973
        %2029 = vmatprep.subr.mxu0 0.0
        %2030 = vmatpush2.msra.mxu0 %v1972
        %2031 = vmatprep.subr.mxu0 0.0
        %2032 = vmatpush2.msra.mxu0 %v1971
        %2033 = vmatprep.subr.mxu0 0.0
        %2034 = vmatpush2.msra.mxu0 %v1970
        %2035 = vmatprep.subr.mxu0 0.0
        %2036 = vmatpush2.msra.mxu0 %v1969
        %2037 = vmatprep.subr.mxu0 0.0
        %2038 = vmatpush2.msra.mxu0 %v1968
        %2039 = vmatprep.subr.mxu0 0.0
        %2040 = vmatpush2.msra.mxu0 %v1967
        %2041 = vmatprep.subr.mxu0 0.0
        %2042 = vmatpush2.msra.mxu0 %v1966
        %2043 = vmatprep.subr.mxu0 0.0
        %2044 = vmatpush2.msra.mxu0 %v1965
        %2045 = vmatprep.mubr.f32.mxu0 %v1947
        %2046 = vmatmul.mubr.f32.gmra.mxu0 %v1945
        %v2047 = vpop.f32.mrf.mxu0
        %v2048 = vadd.f32 0.0, %v2047
        %v2049 = vpop.f32.mrf.mxu0
        %2050 = vdwg.mxu0
        %v2051 = vxor.u32 %v2048, 2147483648
        %v2052 = vmul.f32 %v2051, 1.442695
        %v2053 = vpow.pop %v2052
        %v2054 = vadd.f32 %v2053, 1.0
        %v2055 = vrcp.pop %v2054
        %v2056 = vmul.f32 1.0, %v2055
        %2057 = vmatprep.subr.mxu0 0.0
        %2058 = vmatpush1.msra.mxu0 %v456
        %2059 = vmatprep.subr.mxu0 0.0
        %2060 = vmatpush1.msra.mxu0 %v455
        %2061 = vmatprep.subr.mxu0 0.0
        %2062 = vmatpush1.msra.mxu0 %v454
        %2063 = vmatprep.subr.mxu0 0.0
        %2064 = vmatpush1.msra.mxu0 %v453
        %2065 = vmatprep.subr.mxu0 0.0
        %2066 = vmatpush1.msra.mxu0 %v452
        %2067 = vmatprep.subr.mxu0 0.0
        %2068 = vmatpush1.msra.mxu0 %v451
        %2069 = vmatprep.subr.mxu0 0.0
        %2070 = vmatpush1.msra.mxu0 %v450
        %2071 = vmatprep.subr.mxu0 0.0
        %2072 = vmatpush1.msra.mxu0 %v449
        %2073 = vmatprep.subr.mxu0 0.0
        %2074 = vmatpush1.msra.mxu0 %v448
        %2075 = vmatprep.subr.mxu0 0.0
        %2076 = vmatpush1.msra.mxu0 %v447
        %2077 = vmatprep.subr.mxu0 0.0
        %2078 = vmatpush1.msra.mxu0 %v446
        %2079 = vmatprep.subr.mxu0 0.0
        %2080 = vmatpush1.msra.mxu0 %v445
        %2081 = vmatprep.subr.mxu0 0.0
        %2082 = vmatpush1.msra.mxu0 %v444
        %2083 = vmatprep.subr.mxu0 0.0
        %2084 = vmatpush1.msra.mxu0 %v443
        %2085 = vmatprep.subr.mxu0 0.0
        %2086 = vmatpush1.msra.mxu0 %v442
        %2087 = vmatprep.subr.mxu0 0.0
        %2088 = vmatpush1.msra.mxu0 %v441
        %2089 = vmatprep.subr.mxu0 0.0
        %2090 = vmatpush2.msra.mxu0 0.0
        %2091 = vmatprep.subr.mxu0 0.0
        %2092 = vmatpush2.msra.mxu0 0.0
        %2093 = vmatprep.subr.mxu0 0.0
        %2094 = vmatpush2.msra.mxu0 0.0
        %2095 = vmatprep.subr.mxu0 0.0
        %2096 = vmatpush2.msra.mxu0 0.0
        %2097 = vmatprep.subr.mxu0 0.0
        %2098 = vmatpush2.msra.mxu0 0.0
        %2099 = vmatprep.subr.mxu0 0.0
        %2100 = vmatpush2.msra.mxu0 0.0
        %2101 = vmatprep.subr.mxu0 0.0
        %2102 = vmatpush2.msra.mxu0 0.0
        %2103 = vmatprep.subr.mxu0 0.0
        %2104 = vmatpush2.msra.mxu0 0.0
        %2105 = vmatprep.subr.mxu0 0.0
        %2106 = vmatpush2.msra.mxu0 0.0
        %2107 = vmatprep.subr.mxu0 0.0
        %2108 = vmatpush2.msra.mxu0 0.0
        %2109 = vmatprep.subr.mxu0 0.0
        %2110 = vmatpush2.msra.mxu0 0.0
        %2111 = vmatprep.subr.mxu0 0.0
        %2112 = vmatpush2.msra.mxu0 0.0
        %2113 = vmatprep.subr.mxu0 0.0
        %2114 = vmatpush2.msra.mxu0 0.0
        %2115 = vmatprep.subr.mxu0 0.0
        %2116 = vmatpush2.msra.mxu0 0.0
        %2117 = vmatprep.subr.mxu0 0.0
        %2118 = vmatpush2.msra.mxu0 0.0
        %2119 = vmatprep.subr.mxu0 0.0
        %2120 = vmatpush2.msra.mxu0 0.0
        %2121 = vmatprep.mubr.f32.mxu0 0.0
        %2122 = vmatmul.mubr.f32.gmra.mxu0 %v2056
        %v2123 = vpop.f32.mrf.mxu0
        %v2124 = vadd.f32 0.0, %v2123
        %v2125 = vpop.f32.mrf.mxu0
        %2126 = vdwg.mxu0
        %v2127 = vtanh.pop %v2124
        %2128 = vst [vmem:[%s436] sm:$0x3] %v2127
        %s2129 = sand.u32 %s272, 1
        %s2130 = scalar_lea.sflag [#allocation4], %s2129
        %s2131 = sand.u32 %s272, 1
        %s2132 = smul.addr %s2131, 2
        %s2133 = scalar_lea.vmem [#allocation10], %s2132
        // Predicated region
        $region81: #{tpu_custom_call.1} parent=63 // pred_check
          %p2134 = pneg %p282
        $region82: #{tpu_custom_call.1} parent=63 // pred_check_branch
          %2136 = sbr.rel (%p2134) target = $region84
        $region83: #{tpu_custom_call.1} parent=63 // pred_region
          %s2138 = ssub.s32 32, 32
          %2139 = vsyncadd %s2130, %s2138
          %s2140 = smul.addr %s28, 32
          %s2141 = scalar_lea.hbm %s11, %s2140
          %s2143 = sshll.u32 %s2133, 4
          %s2144 = int_to_ptr.vmem [resolvable:$true] %s2143
          %2146 = dma.vmem_to_hbm [thread:$0]  %s2144, 32, %s2141, %s2130
        $region84: #{tpu_custom_call.1} parent=63 // pred_fallthru
          _
      $region64: #{tpu_custom_call.1} parent=5 // pred_fallthru
        _
      %p2147 = scmp.le.s32.totalorder 2, %s23
      // Predicated region
      $region85: #{tpu_custom_call.1} parent=5 // pred_check
        %p2148 = pneg %p2147
      $region86: #{tpu_custom_call.1} parent=5 // pred_check_branch
        %2150 = sbr.rel (%p2148) target = $region88
      $region87: #{tpu_custom_call.1} parent=5 // pred_region
        %s2151 = ssub.s32 %s23, 2
        // Predicated region
        $region89: #{tpu_custom_call.1} parent=87 // pred_check
          %p2152 = pneg %p288
        $region90: #{tpu_custom_call.1} parent=87 // pred_check_branch
          %2154 = sbr.rel (%p2152) target = $region92
        $region91: #{tpu_custom_call.1} parent=87 // pred_region
          %s2155 = sand.u32 %s273, 1
          %s2156 = scalar_lea.sflag [#allocation4], %s2155
          %s2157 = sand.u32 %s273, 1
          %s2158 = smul.addr %s2157, 2
          %s2159 = scalar_lea.vmem [#allocation10], %s2158
          %2160 = dma.done %s2156, 32
        $region92: #{tpu_custom_call.1} parent=87 // pred_fallthru
          _
      $region88: #{tpu_custom_call.1} parent=5 // pred_fallthru
        _
    $region6: #{tpu_custom_call.1} parent=1 // loop_footer
      %s27 = sadd.s32 1, %s23
    $region7: #{tpu_custom_call.1} parent=1 // loop_footer_branch
      %22 = sbr.rel target = $region3
    $region8: #{tpu_custom_call.1} parent=1 // loop_exit
      _
    %2161 = vsyncpa [#allocation3], 1
    %s2162 = scalar_lea.sflag [#allocation3], 1
    %2163 = vsyncpa %s2162, 1
    %2164 = vsyncpa [#allocation6], 1
    %2165 = vsyncpa [#allocation9], 1
    %2166 = vsyncpa [#allocation4], 1
    %s2167 = scalar_lea.sflag [#allocation4], 1
    %2168 = vsyncpa %s2167, 1

</llo_original>
